<compile_context>
chip_gen: v5e
topology: v5e:2x2
jax: 0.10.0
libtpu: 0.0.40
codegen_flags: <defaults>
</compile_context>

<pallas_src>
import jax
import jax.numpy as jnp
from jax import lax
from jax.experimental import pallas as pl
from jax.experimental.pallas import tpu as pltpu


def _round_up(a, b):
    return (a + b - 1) // b * b


def mlp_kernel(x_ref, w1_ref, w2_ref, w3_ref, o_ref):
    """One row tile of the fused 3-layer MLP.

    x_ref : (tile_n, p)   input rows (any float dtype; cast to weight dtype)
    w1_ref: (p, H)        lin1 weight, transposed + hidden-padded
    w2_ref: (H, H)        lin2 weight, transposed + hidden-padded
    w3_ref: (1, H)        lin3 weight row, hidden-padded
    o_ref : (1, tile_n)   lane-dense output (row index on the lane axis), f32
    """
    wdt = w1_ref.dtype
    # HIGHEST only matters (and only costs MXU passes) for f32 operands; it is
    # a no-op for bf16, so request it exclusively on the exact f32 path.
    hp = lax.Precision.HIGHEST if wdt == jnp.float32 else None

    x = x_ref[...].astype(wdt)

    # Layer 1 + ReLU.  f32 accumulation on the MXU, activation in f32 on the
    # VPU, then immediately drop back to the weight dtype so the (tile_n, 128)
    # intermediate's live range is narrow (relu commutes with the downcast).
    h1 = jnp.dot(x, w1_ref[...], precision=hp, preferred_element_type=jnp.float32)
    h1 = jnp.maximum(h1, 0.0).astype(wdt)

    # Layer 2 + ReLU.
    h2 = jnp.dot(h1, w2_ref[...], precision=hp, preferred_element_type=jnp.float32)
    h2 = jnp.maximum(h2, 0.0).astype(wdt)

    # Layer 3 folded into the lane-dense output transform:
    #   z^T = w3 @ h2^T  -> (1, tile_n)
    # (contract the last dims of both operands -- the standard q.k^T pattern).
    # MXU-wise this makes h2 the stationary operand; it is ~0.6% of the MACs
    # and is hidden under DMA/per-step overhead at these sizes, so it is kept
    # on the MXU rather than moved to a VPU multiply + XLU reduce.
    z = lax.dot_general(
        w3_ref[...], h2,
        dimension_numbers=(((1,), (1,)), ((), ())),
        precision=hp, preferred_element_type=jnp.float32)

    o_ref[...] = jax.nn.sigmoid(z)   # (1, tile_n) f32, unmasked lane-dense store


def neural_net_forward(x, w1, w2, w3, *, tile_n=8192, param_dtype=jnp.bfloat16):
    """Forward pass of NeuralNet.

    x : (N, p) float array.  x is the only large HBM stream -- pass it as
        bfloat16 for the production path (halves HBM traffic and the
        lane-padded VMEM x buffer); f32 also works (exact path when
        param_dtype=float32).
    w1: (20, p), w2: (20, 20), w3: (1, 20)  -- PyTorch (out, in) layout.
        Note: weights are cast to param_dtype (default bf16, ~1e-3 deviation
        vs the f32 PyTorch reference); pass param_dtype=jnp.float32 for exact.
    Returns (N, 1) float32.
    """
    N, p = x.shape
    h = w1.shape[0]
    assert w1.shape == (h, p) and w2.shape == (h, h) and w3.shape == (1, h)

    # Pad hidden dim to a full lane width (exact; tiny one-time cost).
    H = max(128, _round_up(h, 128))
    w1_t = jnp.pad(w1.T, ((0, 0), (0, H - h))).astype(param_dtype)        # (p, H)
    w2_t = jnp.pad(w2.T, ((0, H - h), (0, H - h))).astype(param_dtype)    # (H, H)
    w3_r = jnp.pad(w3, ((0, 0), (0, H - h))).astype(param_dtype)          # (1, H)

    x_itemsize = jnp.dtype(x.dtype).itemsize
    w_itemsize = jnp.dtype(param_dtype).itemsize

    n_rounded = _round_up(max(N, 1), 128)

    # --- tile_n selection -------------------------------------------------
    # (a) requested tile, rounded to the 128-lane output width;
    tile_n = max(128, _round_up(tile_n, 128))
    # (b) VMEM budget: the x block's last dim is p=32 (<128) so it is lane-
    #     padded to 128 in VMEM (4x its logical size), double-buffered; the
    #     intermediates are (tile_n, 128) in wdt plus an f32 matmul temp.
    per_row_bytes = (2 * 128 * x_itemsize          # double-buffered, lane-padded x
                     + 128 * 4                     # f32 dot-output temp
                     + 2 * 128 * w_itemsize)       # h1 + h2 in weight dtype
    vmem_budget = 24 << 20                         # leave headroom under 32 MiB
    vmem_cap = max(128, (vmem_budget // per_row_bytes) // 128 * 128)
    # (c) give v7x's second TensorCore at least one tile of the "parallel"
    #     grid axis (harmless on single-TC v5e/v6e).
    two_core_cap = max(128, _round_up(pl.cdiv(n_rounded, 2), 128))
    tile_n = min(tile_n, n_rounded, vmem_cap, two_core_cap)

    num_tiles = pl.cdiv(N, tile_n)
    n_pad = num_tiles * tile_n
    if n_pad != N:
        # One-time zero pad so every grid step sees a full, in-bounds tile
        # (pad rows yield sigmoid(0)=0.5 and are sliced off below).
        x = jnp.pad(x, ((0, n_pad - N), (0, 0)))

    out = pl.pallas_call(
        mlp_kernel,
        out_shape=jax.ShapeDtypeStruct((1, n_pad), jnp.float32),
        grid_spec=pltpu.PrefetchScalarGridSpec(
            num_scalar_prefetch=0,
            grid=(num_tiles,),
            in_specs=[
                pl.BlockSpec((tile_n, p), lambda i: (i, 0)),   # streamed x tile
                pl.BlockSpec((p, H), lambda i: (0, 0)),        # weights stay resident
                pl.BlockSpec((H, H), lambda i: (0, 0)),
                pl.BlockSpec((1, H), lambda i: (0, 0)),
            ],
            out_specs=pl.BlockSpec((1, tile_n), lambda i: (0, i)),
        ),
        compiler_params=pltpu.CompilerParams(
            dimension_semantics=("parallel",),
            vmem_limit_bytes=32 * 1024 * 1024,
        ),
    )(x, w1_t, w2_t, w3_r)

    return out[0, :N, None]   # (N, 1) float32


def init_params(key, p):
    """torch.nn.Linear-style init, returned in PyTorch (out, in) layout."""
    k1, k2, k3 = jax.random.split(key, 3)

    def linear_w(k, fan_in, fan_out):
        bound = 1.0 / (fan_in ** 0.5)
        return jax.random.uniform(k, (fan_out, fan_in), jnp.float32, -bound, bound)

    return linear_w(k1, p, 20), linear_w(k2, 20, 20), linear_w(k3, 20, 1)


def reference_forward(x, w1, w2, w3):
    hp = lax.Precision.HIGHEST
    x = x.astype(jnp.float32)
    h1 = jnp.maximum(jnp.dot(x, w1.T, precision=hp), 0.0)
    h2 = jnp.maximum(jnp.dot(h1, w2.T, precision=hp), 0.0)
    return jax.nn.sigmoid(jnp.dot(h2, w3.T, precision=hp))


if __name__ == "__main__":
    key = jax.random.PRNGKey(0)
    kx, kw = jax.random.split(key)

    p = 32
    w1, w2, w3 = init_params(kw, p)

    # Case 1: f32 end-to-end exactness check; tile_n=128 -> grid of 4 exercises
    # the pipelined / parallel path.
    N1 = 512
    x1 = jax.random.normal(kx, (N1, p), jnp.float32)
    y1 = jax.block_until_ready(
        neural_net_forward(x1, w1, w2, w3, tile_n=128, param_dtype=jnp.float32))
    ref1 = reference_forward(x1, w1, w2, w3)
    assert y1.shape == (N1, 1)
    assert jnp.allclose(y1, ref1, atol=1e-5, rtol=1e-5), \
        float(jnp.max(jnp.abs(y1 - ref1)))

    # Case 2: ragged batch + bf16 x / bf16 weights (the HBM-traffic-optimized
    # production path) with the default tile selection.  bf16 rounding gives
    # ~1e-3-level deviations vs the f32 reference, so tolerance is relaxed.
    N2 = 300
    x2 = jax.random.normal(jax.random.fold_in(kx, 1), (N2, p), jnp.float32)
    y2 = jax.block_until_ready(
        neural_net_forward(x2.astype(jnp.bfloat16), w1, w2, w3))
    ref2 = reference_forward(x2, w1, w2, w3)
    assert y2.shape == (N2, 1)
    assert jnp.allclose(y2, ref2, atol=2e-2, rtol=0.0), \
        float(jnp.max(jnp.abs(y2 - ref2)))

    print("KERNEL_OK")
</pallas_src>

<mosaic_0001>
module attributes {stable_mosaic.version = 11 : i64} {
  func.func @mlp_kernel(%arg0: i32, %arg1: memref<128x32xf32, #tpu.memory_space<vmem>>, %arg2: memref<32x128xf32, #tpu.memory_space<vmem>>, %arg3: memref<128x128xf32, #tpu.memory_space<vmem>>, %arg4: memref<1x128xf32, #tpu.memory_space<vmem>>, %arg5: memref<1x128xf32, #tpu.memory_space<vmem>>) attributes {dimension_semantics = [#tpu.dimension_semantics<parallel>], iteration_bounds = array<i64: 4>, scalar_prefetch = 0 : i64, scratch_operands = 0 : i64, tpu.core_type = #tpu.core_type<tc>, window_params = [{transform_indices = @transform_0, window_bounds = array<i64: 128, 32>}, {pipeline_mode = #tpu.pipeline_mode<synchronous>, transform_indices = @transform_1, window_bounds = array<i64: 32, 128>}, {pipeline_mode = #tpu.pipeline_mode<synchronous>, transform_indices = @transform_2, window_bounds = array<i64: 128, 128>}, {pipeline_mode = #tpu.pipeline_mode<synchronous>, transform_indices = @transform_3, window_bounds = array<i64: 1, 128>}, {transform_indices = @transform_4, window_bounds = array<i64: 1, 128>}]} {
    %c0 = arith.constant 0 : index
    %c0_0 = arith.constant 0 : index
    %0 = vector.load %arg1[%c0, %c0_0] : memref<128x32xf32, #tpu.memory_space<vmem>>, vector<128x32xf32>
    %c0_1 = arith.constant 0 : index
    %c0_2 = arith.constant 0 : index
    %1 = vector.load %arg2[%c0_1, %c0_2] : memref<32x128xf32, #tpu.memory_space<vmem>>, vector<32x128xf32>
    %cst = arith.constant dense<0.000000e+00> : vector<128x128xf32>
    %2 = tpu.matmul %0, %1, %cst {dimension_numbers = #tpu.dot_dimension_numbers<[1], [0], [0], [1], [0, 0, 1, 1], [], []>, precision = #tpu.contract_precision<fp32>} : vector<128x32xf32>, vector<32x128xf32>, vector<128x128xf32> -> vector<128x128xf32>
    %cst_3 = arith.constant 0.000000e+00 : f32
    %3 = vector.broadcast %cst_3 : f32 to vector<128x128xf32>
    %4 = arith.maximumf %2, %3 : vector<128x128xf32>
    %c0_4 = arith.constant 0 : index
    %c0_5 = arith.constant 0 : index
    %5 = vector.load %arg3[%c0_4, %c0_5] : memref<128x128xf32, #tpu.memory_space<vmem>>, vector<128x128xf32>
    %cst_6 = arith.constant dense<0.000000e+00> : vector<128x128xf32>
    %6 = tpu.matmul %4, %5, %cst_6 {dimension_numbers = #tpu.dot_dimension_numbers<[1], [0], [0], [1], [0, 0, 1, 1], [], []>, precision = #tpu.contract_precision<fp32>} : vector<128x128xf32>, vector<128x128xf32>, vector<128x128xf32> -> vector<128x128xf32>
    %cst_7 = arith.constant 0.000000e+00 : f32
    %7 = vector.broadcast %cst_7 : f32 to vector<128x128xf32>
    %8 = arith.maximumf %6, %7 : vector<128x128xf32>
    %c0_8 = arith.constant 0 : index
    %c0_9 = arith.constant 0 : index
    %9 = vector.load %arg4[%c0_8, %c0_9] : memref<1x128xf32, #tpu.memory_space<vmem>>, vector<1x128xf32>
    %cst_10 = arith.constant dense<0.000000e+00> : vector<1x128xf32>
    %10 = tpu.matmul %9, %8, %cst_10 {dimension_numbers = #tpu.dot_dimension_numbers<[1], [1], [0], [0], [0, 0, 1, 0], [], []>, precision = #tpu.contract_precision<fp32>} : vector<1x128xf32>, vector<128x128xf32>, vector<1x128xf32> -> vector<1x128xf32>
    %11 = arith.negf %10 : vector<1x128xf32>
    %12 = math.exp %11 : vector<1x128xf32>
    %cst_11 = arith.constant 1.000000e+00 : f32
    %13 = vector.broadcast %cst_11 : f32 to vector<1x128xf32>
    %14 = arith.addf %13, %12 : vector<1x128xf32>
    %15 = arith.divf %13, %14 : vector<1x128xf32>
    %c0_12 = arith.constant 0 : index
    %c0_13 = arith.constant 0 : index
    %16 = vector.load %arg5[%c0_12, %c0_13] : memref<1x128xf32, #tpu.memory_space<vmem>>, vector<1x128xf32>
    tpu.vector_store %arg5[%c0_12, %c0_13], %15 {strides = array<i32>} : memref<1x128xf32, #tpu.memory_space<vmem>>, vector<1x128xf32>,
    return
  }
  func.func @transform_0(%arg0: i32) -> (i32, i32) {
    %c0_i32 = arith.constant 0 : i32
    %c0_i32_0 = arith.constant 0 : i32
    return %arg0, %c0_i32 : i32, i32
  }
  func.func @transform_1(%arg0: i32) -> (i32, i32) {
    %c0_i32 = arith.constant 0 : i32
    %c0_i32_0 = arith.constant 0 : i32
    %c0_i32_1 = arith.constant 0 : i32
    return %c0_i32, %c0_i32_0 : i32, i32
  }
  func.func @transform_2(%arg0: i32) -> (i32, i32) {
    %c0_i32 = arith.constant 0 : i32
    %c0_i32_0 = arith.constant 0 : i32
    %c0_i32_1 = arith.constant 0 : i32
    return %c0_i32, %c0_i32_0 : i32, i32
  }
  func.func @transform_3(%arg0: i32) -> (i32, i32) {
    %c0_i32 = arith.constant 0 : i32
    %c0_i32_0 = arith.constant 0 : i32
    %c0_i32_1 = arith.constant 0 : i32
    return %c0_i32, %c0_i32_0 : i32, i32
  }
  func.func @transform_4(%arg0: i32) -> (i32, i32) {
    %c0_i32 = arith.constant 0 : i32
    %c0_i32_0 = arith.constant 0 : i32
    return %c0_i32, %arg0 : i32, i32
  }
}

</mosaic_0001>

<llo_original>
// kernel: tpu_custom_call.1
$region0: #{tpu_custom_call.1}
  #allocation0 [shape = 'u32[]', space=smem, size = 0x4, offset = 0x4, fixed_abs, tag = 'smem constant byte address 0x4 - core index']
  #allocation1 [shape = 'u32[72,128]{1,0:T(1,128)}', space=vmem, size = 0x9000, scoped, tag = 'internal scratch']
  %s0 = inlined_call_operand.vmem [shape: f32[512,32], index: 0, kind: input, shape index: {}]
  %s1 = inlined_call_operand.vmem [shape: f32[32,128], index: 1, kind: input, shape index: {}]
  %s2 = inlined_call_operand.vmem [shape: f32[128,128], index: 2, kind: input, shape index: {}]
  %s3 = inlined_call_operand.vmem [shape: f32[1,128], index: 3, kind: input, shape index: {}]
  %s4 = inlined_call_operand.hbm [shape: f32[1,512], index: 4, kind: output, shape index: {}]
  %s5 = sld [smem:[#allocation0]]
  $region49: #{tpu_custom_call.1} parent=0
    _
  %s7 = ssub.s32 1, %s5
  %s8 = scalar_select 0, %s7, %s5
  $region1: #{tpu_custom_call.1} parent=0
    #allocation2 [shape = 'u8[1024]{0}', space=vmem, size = 0x400, scoped, tag = 'output window, operand 0']
    #allocation3 [shape = 's32[2]{0}', space=sflag, size = 0x8, scoped, tag = 'scoped memory for tpu_custom_call.1']
    %9 = vsyncpa [#allocation3], 0
    %s10 = scalar_lea.sflag [#allocation3], 1
    %11 = vsyncpa %s10, 0
    loop: start=0, step=1, limit=6
    $region2: #{tpu_custom_call.1} parent=1 // loop_pre_header
      _
    $region3: #{tpu_custom_call.1} parent=1 // loop_header
      %s13 = sphi 0, %s17
      %p14 = scmp.ge.s32.totalorder %s13, 6
      %s23 = sphi 0, %s25
      %s26 = sphi 0, %s23
      %s27 = sphi 0, %s26
      %s43 = sphi 0, %s27
      %s47 = sphi 0, %s47
      %s49 = sphi 0, %s47
      %s50 = sphi 0, %s49
      %s64 = sphi 0, %s50
      %s68 = sphi 0, %s68
      %s70 = sphi 0, %s68
      %s71 = sphi 0, %s70
      %s85 = sphi 0, %s71
      %s89 = sphi 0, %s89
      %s91 = sphi 0, %s89
      %s92 = sphi 0, %s91
      %s106 = sphi 0, %s92
      %s112 = sphi 0, %s114
      %s115 = sphi 0, %s112
      %s116 = sphi 0, %s115
      %s132 = sphi 0, %s116
    $region4: #{tpu_custom_call.1} parent=1 // loop_header_branch
      %16 = sbr.rel (%p14) target = $region8
    $region5: #{tpu_custom_call.1} parent=1 // loop_body
      %s18 = ssub.s32 %s13, 1
      %s19 = ssub.s32 %s13, 2
      %s20 = sadd.s32 %s13, 1
      %s21 = ssub.s32 %s13, %s20
      %p22 = scmp.eq.s32.totalorder %s21, 0
      %s24 = sadd.s32 %s23, 1
      %s25 = scalar_select %p22, %s23, %s24
      %p28 = pneg %p22
      %p29 = scmp.eq.s32.totalorder %s13, 3
      %p30 = por %p28, %p29
      %p31 = scmp.ne.s32.totalorder %s23, %s26
      %p32 = scmp.eq.s32.totalorder %s13, 0
      %p33 = por %p31, %p32
      %p34 = scmp.ne.s32.totalorder %s23, %s26
      %p35 = scmp.eq.s32.totalorder %s18, 3
      %p36 = por %p34, %p35
      %p37 = scmp.ne.s32.totalorder %s26, %s27
      %p38 = scmp.eq.s32.totalorder %s18, 0
      %p39 = por %p37, %p38
      %p40 = scmp.ne.s32.totalorder %s26, %s27
      %p41 = scmp.eq.s32.totalorder %s19, 3
      %p42 = por %p40, %p41
      %p44 = scmp.ne.s32.totalorder %s27, %s43
      %p45 = scmp.eq.s32.totalorder %s19, 0
      %p46 = por %p44, %p45
      %s48 = sadd.s32 %s47, 1
      %p51 = scmp.eq.s32.totalorder %s13, 3
      %p52 = scmp.ne.s32.totalorder %s47, %s49
      %p53 = scmp.eq.s32.totalorder %s13, 0
      %p54 = por %p52, %p53
      %p55 = scmp.ne.s32.totalorder %s47, %s49
      %p56 = scmp.eq.s32.totalorder %s18, 3
      %p57 = por %p55, %p56
      %p58 = scmp.ne.s32.totalorder %s49, %s50
      %p59 = scmp.eq.s32.totalorder %s18, 0
      %p60 = por %p58, %p59
      %p61 = scmp.ne.s32.totalorder %s49, %s50
      %p62 = scmp.eq.s32.totalorder %s19, 3
      %p63 = por %p61, %p62
      %p65 = scmp.ne.s32.totalorder %s50, %s64
      %p66 = scmp.eq.s32.totalorder %s19, 0
      %p67 = por %p65, %p66
      %s69 = sadd.s32 %s68, 1
      %p72 = scmp.eq.s32.totalorder %s13, 3
      %p73 = scmp.ne.s32.totalorder %s68, %s70
      %p74 = scmp.eq.s32.totalorder %s13, 0
      %p75 = por %p73, %p74
      %p76 = scmp.ne.s32.totalorder %s68, %s70
      %p77 = scmp.eq.s32.totalorder %s18, 3
      %p78 = por %p76, %p77
      %p79 = scmp.ne.s32.totalorder %s70, %s71
      %p80 = scmp.eq.s32.totalorder %s18, 0
      %p81 = por %p79, %p80
      %p82 = scmp.ne.s32.totalorder %s70, %s71
      %p83 = scmp.eq.s32.totalorder %s19, 3
      %p84 = por %p82, %p83
      %p86 = scmp.ne.s32.totalorder %s71, %s85
      %p87 = scmp.eq.s32.totalorder %s19, 0
      %p88 = por %p86, %p87
      %s90 = sadd.s32 %s89, 1
      %p93 = scmp.eq.s32.totalorder %s13, 3
      %p94 = scmp.ne.s32.totalorder %s89, %s91
      %p95 = scmp.eq.s32.totalorder %s13, 0
      %p96 = por %p94, %p95
      %p97 = scmp.ne.s32.totalorder %s89, %s91
      %p98 = scmp.eq.s32.totalorder %s18, 3
      %p99 = por %p97, %p98
      %p100 = scmp.ne.s32.totalorder %s91, %s92
      %p101 = scmp.eq.s32.totalorder %s18, 0
      %p102 = por %p100, %p101
      %p103 = scmp.ne.s32.totalorder %s91, %s92
      %p104 = scmp.eq.s32.totalorder %s19, 3
      %p105 = por %p103, %p104
      %p107 = scmp.ne.s32.totalorder %s92, %s106
      %p108 = scmp.eq.s32.totalorder %s19, 0
      %p109 = por %p107, %p108
      %s110 = ssub.s32 %s13, %s20
      %p111 = scmp.eq.s32.totalorder %s110, 0
      %s113 = sadd.s32 %s112, 1
      %s114 = scalar_select %p111, %s112, %s113
      %p117 = pneg %p111
      %p118 = scmp.eq.s32.totalorder %s13, 3
      %p119 = por %p117, %p118
      %p120 = scmp.ne.s32.totalorder %s112, %s115
      %p121 = scmp.eq.s32.totalorder %s13, 0
      %p122 = por %p120, %p121
      %p123 = scmp.ne.s32.totalorder %s112, %s115
      %p124 = scmp.eq.s32.totalorder %s18, 3
      %p125 = por %p123, %p124
      %p126 = scmp.ne.s32.totalorder %s115, %s116
      %p127 = scmp.eq.s32.totalorder %s18, 0
      %p128 = por %p126, %p127
      %p129 = scmp.ne.s32.totalorder %s115, %s116
      %p130 = scmp.eq.s32.totalorder %s19, 3
      %p131 = por %p129, %p130
      %p133 = scmp.ne.s32.totalorder %s116, %s132
      %p134 = scmp.eq.s32.totalorder %s19, 0
      %p135 = por %p133, %p134
      %p136 = scmp.le.s32.totalorder 1, %s13
      %p137 = scmp.lt.s32.totalorder %s13, 5
      %p138 = pnand %p136, %p137
      %p139 = pneg %p138
      // Predicated region
      $region9: #{tpu_custom_call.1} parent=5 // pred_check
        _
      $region10: #{tpu_custom_call.1} parent=5 // pred_check_branch
        %141 = sbr.rel (%p138) target = $region12
      $region11: #{tpu_custom_call.1} parent=5 // pred_region
        %s142 = ssub.s32 %s13, 1
        // Predicated region
        $region13: #{tpu_custom_call.1} parent=11 // pred_check
          %p143 = pneg %p60
        $region14: #{tpu_custom_call.1} parent=11 // pred_check_branch
          %145 = sbr.rel (%p143) target = $region16
        $region15: #{tpu_custom_call.1} parent=11 // pred_region
          _
        $region16: #{tpu_custom_call.1} parent=11 // pred_fallthru
          _
        // Predicated region
        $region17: #{tpu_custom_call.1} parent=11 // pred_check
          %p146 = pneg %p81
        $region18: #{tpu_custom_call.1} parent=11 // pred_check_branch
          %148 = sbr.rel (%p146) target = $region20
        $region19: #{tpu_custom_call.1} parent=11 // pred_region
          _
        $region20: #{tpu_custom_call.1} parent=11 // pred_fallthru
          _
        // Predicated region
        $region21: #{tpu_custom_call.1} parent=11 // pred_check
          %p149 = pneg %p102
        $region22: #{tpu_custom_call.1} parent=11 // pred_check_branch
          %151 = sbr.rel (%p149) target = $region24
        $region23: #{tpu_custom_call.1} parent=11 // pred_region
          _
        $region24: #{tpu_custom_call.1} parent=11 // pred_fallthru
          _
      $region12: #{tpu_custom_call.1} parent=5 // pred_fallthru
        _
      %p152 = scmp.lt.s32.totalorder %s13, 4
      // Predicated region
      $region25: #{tpu_custom_call.1} parent=5 // pred_check
        %p153 = pneg %p152
      $region26: #{tpu_custom_call.1} parent=5 // pred_check_branch
        %155 = sbr.rel (%p153) target = $region28
      $region27: #{tpu_custom_call.1} parent=5 // pred_region
        // Predicated region
        $region29: #{tpu_custom_call.1} parent=27 // pred_check
          %p156 = pneg %p33
        $region30: #{tpu_custom_call.1} parent=27 // pred_check_branch
          %158 = sbr.rel (%p156) target = $region32
        $region31: #{tpu_custom_call.1} parent=27 // pred_region
          %s159 = smul.u32 16, %s13
          %p160 = scmp.lt.s32.totalorder %s159, 63
          %s161 = scalar_select %p160, %s159, 63
          %s162 = smul.addr %s161, 8
          %s163 = scalar_lea.vmem %s0, %s162
          %s164 = smul.u32 16, %s13
        $region32: #{tpu_custom_call.1} parent=27 // pred_fallthru
          _
      $region28: #{tpu_custom_call.1} parent=5 // pred_fallthru
        _
      %p165 = scmp.le.s32.totalorder 1, %s13
      %p166 = scmp.lt.s32.totalorder %s13, 5
      %p167 = pnand %p165, %p166
      %p168 = pneg %p167
      // Predicated region
      $region33: #{tpu_custom_call.1} parent=5 // pred_check
        _
      $region34: #{tpu_custom_call.1} parent=5 // pred_check_branch
        %170 = sbr.rel (%p167) target = $region36
      $region35: #{tpu_custom_call.1} parent=5 // pred_region
        %s171 = ssub.s32 %s13, 1
        %s172 = smul.u32 16, %s18
        %p173 = scmp.lt.s32.totalorder %s172, 63
        %s174 = scalar_select %p173, %s172, 63
        %s175 = smul.addr %s174, 8
        %s176 = scalar_lea.vmem %s0, %s175
        %p177 = pneg %p39
        %p178 = pneg %p36
        %p179 = pneg %p60
        %p180 = pneg %p57
        %p181 = pneg %p81
        %p182 = pneg %p78
        %p183 = pneg %p102
        %p184 = pneg %p99
        %p185 = pneg %p128
        %p186 = pneg %p125
        %s187 = sand.u32 %s115, 1
        %s188 = scalar_lea.sflag [#allocation3], %s187
        %s189 = sand.u32 %s115, 1
        %s190 = scalar_lea.vmem [#allocation2], %s189
        %s191 = smul.u32 16, %s18
        %p192 = scmp.lt.s32.totalorder %s191, 63
        %s193 = scalar_select %p192, %s191, 63
        %s194 = smul.addr %s193, 8
        %s195 = scalar_lea.vmem %s0, %s194
        %s196 = smul.u32 16, %s18
        %v197 = vld [vmem:[%s195] sm:$0xff]
        %v198 = vld [vmem:[%s195 + $0x8] sm:$0xff]
        %v199 = vld [vmem:[%s195 + $0x10] sm:$0xff]
        %v200 = vld [vmem:[%s195 + $0x18] sm:$0xff]
        %v201 = vld [vmem:[%s195 + $0x20] sm:$0xff]
        %v202 = vld [vmem:[%s195 + $0x28] sm:$0xff]
        %v203 = vld [vmem:[%s195 + $0x30] sm:$0xff]
        %v204 = vld [vmem:[%s195 + $0x38] sm:$0xff]
        %v205 = vld [vmem:[%s195 + $0x40] sm:$0xff]
        %v206 = vld [vmem:[%s195 + $0x48] sm:$0xff]
        %v207 = vld [vmem:[%s195 + $0x50] sm:$0xff]
        %v208 = vld [vmem:[%s195 + $0x58] sm:$0xff]
        %v209 = vld [vmem:[%s195 + $0x60] sm:$0xff]
        %v210 = vld [vmem:[%s195 + $0x68] sm:$0xff]
        %v211 = vld [vmem:[%s195 + $0x70] sm:$0xff]
        %v212 = vld [vmem:[%s195 + $0x78] sm:$0xff]
        %v213 = vld [vmem:[%s1] sm:$0xff]
        %v214 = vld [vmem:[%s1 + $0x8] sm:$0xff]
        %v215 = vld [vmem:[%s1 + $0x10] sm:$0xff]
        %v216 = vld [vmem:[%s1 + $0x18] sm:$0xff]
        %vm217 = vcmask 261120
        %v219 = vsel %vm217, %v197, 0
        %v222 = vsel %vm217, %v198, 0
        %v225 = vsel %vm217, %v199, 0
        %v228 = vsel %vm217, %v200, 0
        %v231 = vsel %vm217, %v201, 0
        %v234 = vsel %vm217, %v202, 0
        %v237 = vsel %vm217, %v203, 0
        %v240 = vsel %vm217, %v204, 0
        %v243 = vsel %vm217, %v205, 0
        %v246 = vsel %vm217, %v206, 0
        %v249 = vsel %vm217, %v207, 0
        %v252 = vsel %vm217, %v208, 0
        %v255 = vsel %vm217, %v209, 0
        %v258 = vsel %vm217, %v210, 0
        %v261 = vsel %vm217, %v211, 0
        %v264 = vsel %vm217, %v212, 0
        %266 = vmatpush.msra.mxu0 0.0
        %267 = vmatpush.msra.mxu0 0.0
        %268 = vmatpush.msra.mxu0 0.0
        %269 = vmatpush.msra.mxu0 0.0
        %270 = vmatpush.msra.mxu0 0.0
        %271 = vmatpush.msra.mxu0 0.0
        %272 = vmatpush.msra.mxu0 0.0
        %273 = vmatpush.msra.mxu0 0.0
        %274 = vmatpush.msra.mxu0 0.0
        %275 = vmatpush.msra.mxu0 0.0
        %276 = vmatpush.msra.mxu0 0.0
        %277 = vmatpush.msra.mxu0 0.0
        %v278 = vand.u32 %v216, 4294901760
        %279 = vmatpush.msra.mxu0 %v278
        %v280 = vand.u32 %v215, 4294901760
        %281 = vmatpush.msra.mxu0 %v280
        %v282 = vand.u32 %v214, 4294901760
        %283 = vmatpush.msra.mxu0 %v282
        %v284 = vand.u32 %v213, 4294901760
        %285 = vmatpush.msra.mxu0 %v284
        %v286 = vand.u32 %v219, 4294901760
        %v287 = vsub.f32 %v219, %v286
        %v288 = vand.u32 %v287, 4294901760
        %v289 = vsub.f32 %v287, %v288
        %v290 = vand.u32 %v289, 4294901760
        %291 = vmatmul.f32.gmra.mxu0 %v290
        %v292 = vpop.f32.mrf.mxu0
        %v293 = vadd.f32 0.0, %v292
        %v294 = vand.u32 %v222, 4294901760
        %v295 = vsub.f32 %v222, %v294
        %v296 = vand.u32 %v295, 4294901760
        %v297 = vsub.f32 %v295, %v296
        %v298 = vand.u32 %v297, 4294901760
        %299 = vmatmul.f32.gmra.mxu0 %v298
        %v300 = vpop.f32.mrf.mxu0
        %v301 = vadd.f32 0.0, %v300
        %v302 = vand.u32 %v225, 4294901760
        %v303 = vsub.f32 %v225, %v302
        %v304 = vand.u32 %v303, 4294901760
        %v305 = vsub.f32 %v303, %v304
        %v306 = vand.u32 %v305, 4294901760
        %307 = vmatmul.f32.gmra.mxu0 %v306
        %v308 = vpop.f32.mrf.mxu0
        %v309 = vadd.f32 0.0, %v308
        %v310 = vand.u32 %v228, 4294901760
        %v311 = vsub.f32 %v228, %v310
        %v312 = vand.u32 %v311, 4294901760
        %v313 = vsub.f32 %v311, %v312
        %v314 = vand.u32 %v313, 4294901760
        %315 = vmatmul.f32.gmra.mxu0 %v314
        %v316 = vpop.f32.mrf.mxu0
        %v317 = vadd.f32 0.0, %v316
        %v318 = vand.u32 %v231, 4294901760
        %v319 = vsub.f32 %v231, %v318
        %v320 = vand.u32 %v319, 4294901760
        %v321 = vsub.f32 %v319, %v320
        %v322 = vand.u32 %v321, 4294901760
        %323 = vmatmul.f32.gmra.mxu0 %v322
        %v324 = vpop.f32.mrf.mxu0
        %v325 = vadd.f32 0.0, %v324
        %v326 = vand.u32 %v234, 4294901760
        %v327 = vsub.f32 %v234, %v326
        %v328 = vand.u32 %v327, 4294901760
        %v329 = vsub.f32 %v327, %v328
        %v330 = vand.u32 %v329, 4294901760
        %331 = vmatmul.f32.gmra.mxu0 %v330
        %v332 = vpop.f32.mrf.mxu0
        %v333 = vadd.f32 0.0, %v332
        %v334 = vand.u32 %v237, 4294901760
        %v335 = vsub.f32 %v237, %v334
        %v336 = vand.u32 %v335, 4294901760
        %v337 = vsub.f32 %v335, %v336
        %v338 = vand.u32 %v337, 4294901760
        %339 = vmatmul.f32.gmra.mxu0 %v338
        %v340 = vpop.f32.mrf.mxu0
        %v341 = vadd.f32 0.0, %v340
        %v342 = vand.u32 %v240, 4294901760
        %v343 = vsub.f32 %v240, %v342
        %v344 = vand.u32 %v343, 4294901760
        %v345 = vsub.f32 %v343, %v344
        %v346 = vand.u32 %v345, 4294901760
        %347 = vmatmul.f32.gmra.mxu0 %v346
        %v348 = vpop.f32.mrf.mxu0
        %v349 = vadd.f32 0.0, %v348
        %v350 = vand.u32 %v243, 4294901760
        %v351 = vsub.f32 %v243, %v350
        %v352 = vand.u32 %v351, 4294901760
        %v353 = vsub.f32 %v351, %v352
        %v354 = vand.u32 %v353, 4294901760
        %355 = vmatmul.f32.gmra.mxu0 %v354
        %v356 = vpop.f32.mrf.mxu0
        %v357 = vadd.f32 0.0, %v356
        %v358 = vand.u32 %v246, 4294901760
        %v359 = vsub.f32 %v246, %v358
        %v360 = vand.u32 %v359, 4294901760
        %v361 = vsub.f32 %v359, %v360
        %v362 = vand.u32 %v361, 4294901760
        %363 = vmatmul.f32.gmra.mxu0 %v362
        %v364 = vpop.f32.mrf.mxu0
        %v365 = vadd.f32 0.0, %v364
        %v366 = vand.u32 %v249, 4294901760
        %v367 = vsub.f32 %v249, %v366
        %v368 = vand.u32 %v367, 4294901760
        %v369 = vsub.f32 %v367, %v368
        %v370 = vand.u32 %v369, 4294901760
        %371 = vmatmul.f32.gmra.mxu0 %v370
        %v372 = vpop.f32.mrf.mxu0
        %v373 = vadd.f32 0.0, %v372
        %v374 = vand.u32 %v252, 4294901760
        %v375 = vsub.f32 %v252, %v374
        %v376 = vand.u32 %v375, 4294901760
        %v377 = vsub.f32 %v375, %v376
        %v378 = vand.u32 %v377, 4294901760
        %379 = vmatmul.f32.gmra.mxu0 %v378
        %v380 = vpop.f32.mrf.mxu0
        %v381 = vadd.f32 0.0, %v380
        %v382 = vand.u32 %v255, 4294901760
        %v383 = vsub.f32 %v255, %v382
        %v384 = vand.u32 %v383, 4294901760
        %v385 = vsub.f32 %v383, %v384
        %v386 = vand.u32 %v385, 4294901760
        %387 = vmatmul.f32.gmra.mxu0 %v386
        %v388 = vpop.f32.mrf.mxu0
        %v389 = vadd.f32 0.0, %v388
        %v390 = vand.u32 %v258, 4294901760
        %v391 = vsub.f32 %v258, %v390
        %v392 = vand.u32 %v391, 4294901760
        %v393 = vsub.f32 %v391, %v392
        %v394 = vand.u32 %v393, 4294901760
        %395 = vmatmul.f32.gmra.mxu0 %v394
        %v396 = vpop.f32.mrf.mxu0
        %v397 = vadd.f32 0.0, %v396
        %v398 = vand.u32 %v261, 4294901760
        %v399 = vsub.f32 %v261, %v398
        %v400 = vand.u32 %v399, 4294901760
        %v401 = vsub.f32 %v399, %v400
        %v402 = vand.u32 %v401, 4294901760
        %403 = vmatmul.f32.gmra.mxu0 %v402
        %v404 = vpop.f32.mrf.mxu0
        %v405 = vadd.f32 0.0, %v404
        %v406 = vand.u32 %v264, 4294901760
        %v407 = vsub.f32 %v264, %v406
        %v408 = vand.u32 %v407, 4294901760
        %v409 = vsub.f32 %v407, %v408
        %v410 = vand.u32 %v409, 4294901760
        %411 = vmatmul.f32.gmra.mxu0 %v410
        %v412 = vpop.f32.mrf.mxu0
        %v413 = vadd.f32 0.0, %v412
        %414 = vdwg.mxu0
        %415 = vmatpush.msra.mxu0 0.0
        %416 = vmatpush.msra.mxu0 0.0
        %417 = vmatpush.msra.mxu0 0.0
        %418 = vmatpush.msra.mxu0 0.0
        %419 = vmatpush.msra.mxu0 0.0
        %420 = vmatpush.msra.mxu0 0.0
        %421 = vmatpush.msra.mxu0 0.0
        %422 = vmatpush.msra.mxu0 0.0
        %423 = vmatpush.msra.mxu0 0.0
        %424 = vmatpush.msra.mxu0 0.0
        %425 = vmatpush.msra.mxu0 0.0
        %426 = vmatpush.msra.mxu0 0.0
        %v427 = vand.u32 %v216, 4294901760
        %v428 = vsub.f32 %v216, %v427
        %v429 = vand.u32 %v428, 4294901760
        %v430 = vsub.f32 %v428, %v429
        %v431 = vand.u32 %v430, 4294901760
        %432 = vmatpush.msra.mxu0 %v431
        %v433 = vand.u32 %v215, 4294901760
        %v434 = vsub.f32 %v215, %v433
        %v435 = vand.u32 %v434, 4294901760
        %v436 = vsub.f32 %v434, %v435
        %v437 = vand.u32 %v436, 4294901760
        %438 = vmatpush.msra.mxu0 %v437
        %v439 = vand.u32 %v214, 4294901760
        %v440 = vsub.f32 %v214, %v439
        %v441 = vand.u32 %v440, 4294901760
        %v442 = vsub.f32 %v440, %v441
        %v443 = vand.u32 %v442, 4294901760
        %444 = vmatpush.msra.mxu0 %v443
        %v445 = vand.u32 %v213, 4294901760
        %v446 = vsub.f32 %v213, %v445
        %v447 = vand.u32 %v446, 4294901760
        %v448 = vsub.f32 %v446, %v447
        %v449 = vand.u32 %v448, 4294901760
        %450 = vmatpush.msra.mxu0 %v449
        %v451 = vand.u32 %v219, 4294901760
        %452 = vmatmul.f32.gmra.mxu0 %v451
        %v453 = vpop.f32.mrf.mxu0
        %v454 = vadd.f32 %v293, %v453
        %v455 = vand.u32 %v222, 4294901760
        %456 = vmatmul.f32.gmra.mxu0 %v455
        %v457 = vpop.f32.mrf.mxu0
        %v458 = vadd.f32 %v301, %v457
        %v459 = vand.u32 %v225, 4294901760
        %460 = vmatmul.f32.gmra.mxu0 %v459
        %v461 = vpop.f32.mrf.mxu0
        %v462 = vadd.f32 %v309, %v461
        %v463 = vand.u32 %v228, 4294901760
        %464 = vmatmul.f32.gmra.mxu0 %v463
        %v465 = vpop.f32.mrf.mxu0
        %v466 = vadd.f32 %v317, %v465
        %v467 = vand.u32 %v231, 4294901760
        %468 = vmatmul.f32.gmra.mxu0 %v467
        %v469 = vpop.f32.mrf.mxu0
        %v470 = vadd.f32 %v325, %v469
        %v471 = vand.u32 %v234, 4294901760
        %472 = vmatmul.f32.gmra.mxu0 %v471
        %v473 = vpop.f32.mrf.mxu0
        %v474 = vadd.f32 %v333, %v473
        %v475 = vand.u32 %v237, 4294901760
        %476 = vmatmul.f32.gmra.mxu0 %v475
        %v477 = vpop.f32.mrf.mxu0
        %v478 = vadd.f32 %v341, %v477
        %v479 = vand.u32 %v240, 4294901760
        %480 = vmatmul.f32.gmra.mxu0 %v479
        %v481 = vpop.f32.mrf.mxu0
        %v482 = vadd.f32 %v349, %v481
        %v483 = vand.u32 %v243, 4294901760
        %484 = vmatmul.f32.gmra.mxu0 %v483
        %v485 = vpop.f32.mrf.mxu0
        %v486 = vadd.f32 %v357, %v485
        %v487 = vand.u32 %v246, 4294901760
        %488 = vmatmul.f32.gmra.mxu0 %v487
        %v489 = vpop.f32.mrf.mxu0
        %v490 = vadd.f32 %v365, %v489
        %v491 = vand.u32 %v249, 4294901760
        %492 = vmatmul.f32.gmra.mxu0 %v491
        %v493 = vpop.f32.mrf.mxu0
        %v494 = vadd.f32 %v373, %v493
        %v495 = vand.u32 %v252, 4294901760
        %496 = vmatmul.f32.gmra.mxu0 %v495
        %v497 = vpop.f32.mrf.mxu0
        %v498 = vadd.f32 %v381, %v497
        %v499 = vand.u32 %v255, 4294901760
        %500 = vmatmul.f32.gmra.mxu0 %v499
        %v501 = vpop.f32.mrf.mxu0
        %v502 = vadd.f32 %v389, %v501
        %v503 = vand.u32 %v258, 4294901760
        %504 = vmatmul.f32.gmra.mxu0 %v503
        %v505 = vpop.f32.mrf.mxu0
        %v506 = vadd.f32 %v397, %v505
        %v507 = vand.u32 %v261, 4294901760
        %508 = vmatmul.f32.gmra.mxu0 %v507
        %v509 = vpop.f32.mrf.mxu0
        %v510 = vadd.f32 %v405, %v509
        %v511 = vand.u32 %v264, 4294901760
        %512 = vmatmul.f32.gmra.mxu0 %v511
        %v513 = vpop.f32.mrf.mxu0
        %v514 = vadd.f32 %v413, %v513
        %515 = vdwg.mxu0
        %516 = vmatpush.msra.mxu0 0.0
        %517 = vmatpush.msra.mxu0 0.0
        %518 = vmatpush.msra.mxu0 0.0
        %519 = vmatpush.msra.mxu0 0.0
        %520 = vmatpush.msra.mxu0 0.0
        %521 = vmatpush.msra.mxu0 0.0
        %522 = vmatpush.msra.mxu0 0.0
        %523 = vmatpush.msra.mxu0 0.0
        %524 = vmatpush.msra.mxu0 0.0
        %525 = vmatpush.msra.mxu0 0.0
        %526 = vmatpush.msra.mxu0 0.0
        %527 = vmatpush.msra.mxu0 0.0
        %v528 = vand.u32 %v216, 4294901760
        %v529 = vsub.f32 %v216, %v528
        %530 = vmatpush.msra.mxu0 %v529
        %v531 = vand.u32 %v215, 4294901760
        %v532 = vsub.f32 %v215, %v531
        %533 = vmatpush.msra.mxu0 %v532
        %v534 = vand.u32 %v214, 4294901760
        %v535 = vsub.f32 %v214, %v534
        %536 = vmatpush.msra.mxu0 %v535
        %v537 = vand.u32 %v213, 4294901760
        %v538 = vsub.f32 %v213, %v537
        %539 = vmatpush.msra.mxu0 %v538
        %v540 = vand.u32 %v219, 4294901760
        %v541 = vsub.f32 %v219, %v540
        %542 = vmatmul.f32.gmra.mxu0 %v541
        %v543 = vpop.f32.mrf.mxu0
        %v544 = vadd.f32 %v454, %v543
        %v545 = vand.u32 %v222, 4294901760
        %v546 = vsub.f32 %v222, %v545
        %547 = vmatmul.f32.gmra.mxu0 %v546
        %v548 = vpop.f32.mrf.mxu0
        %v549 = vadd.f32 %v458, %v548
        %v550 = vand.u32 %v225, 4294901760
        %v551 = vsub.f32 %v225, %v550
        %552 = vmatmul.f32.gmra.mxu0 %v551
        %v553 = vpop.f32.mrf.mxu0
        %v554 = vadd.f32 %v462, %v553
        %v555 = vand.u32 %v228, 4294901760
        %v556 = vsub.f32 %v228, %v555
        %557 = vmatmul.f32.gmra.mxu0 %v556
        %v558 = vpop.f32.mrf.mxu0
        %v559 = vadd.f32 %v466, %v558
        %v560 = vand.u32 %v231, 4294901760
        %v561 = vsub.f32 %v231, %v560
        %562 = vmatmul.f32.gmra.mxu0 %v561
        %v563 = vpop.f32.mrf.mxu0
        %v564 = vadd.f32 %v470, %v563
        %v565 = vand.u32 %v234, 4294901760
        %v566 = vsub.f32 %v234, %v565
        %567 = vmatmul.f32.gmra.mxu0 %v566
        %v568 = vpop.f32.mrf.mxu0
        %v569 = vadd.f32 %v474, %v568
        %v570 = vand.u32 %v237, 4294901760
        %v571 = vsub.f32 %v237, %v570
        %572 = vmatmul.f32.gmra.mxu0 %v571
        %v573 = vpop.f32.mrf.mxu0
        %v574 = vadd.f32 %v478, %v573
        %v575 = vand.u32 %v240, 4294901760
        %v576 = vsub.f32 %v240, %v575
        %577 = vmatmul.f32.gmra.mxu0 %v576
        %v578 = vpop.f32.mrf.mxu0
        %v579 = vadd.f32 %v482, %v578
        %v580 = vand.u32 %v243, 4294901760
        %v581 = vsub.f32 %v243, %v580
        %582 = vmatmul.f32.gmra.mxu0 %v581
        %v583 = vpop.f32.mrf.mxu0
        %v584 = vadd.f32 %v486, %v583
        %v585 = vand.u32 %v246, 4294901760
        %v586 = vsub.f32 %v246, %v585
        %587 = vmatmul.f32.gmra.mxu0 %v586
        %v588 = vpop.f32.mrf.mxu0
        %v589 = vadd.f32 %v490, %v588
        %v590 = vand.u32 %v249, 4294901760
        %v591 = vsub.f32 %v249, %v590
        %592 = vmatmul.f32.gmra.mxu0 %v591
        %v593 = vpop.f32.mrf.mxu0
        %v594 = vadd.f32 %v494, %v593
        %v595 = vand.u32 %v252, 4294901760
        %v596 = vsub.f32 %v252, %v595
        %597 = vmatmul.f32.gmra.mxu0 %v596
        %v598 = vpop.f32.mrf.mxu0
        %v599 = vadd.f32 %v498, %v598
        %v600 = vand.u32 %v255, 4294901760
        %v601 = vsub.f32 %v255, %v600
        %602 = vmatmul.f32.gmra.mxu0 %v601
        %v603 = vpop.f32.mrf.mxu0
        %v604 = vadd.f32 %v502, %v603
        %v605 = vand.u32 %v258, 4294901760
        %v606 = vsub.f32 %v258, %v605
        %607 = vmatmul.f32.gmra.mxu0 %v606
        %v608 = vpop.f32.mrf.mxu0
        %v609 = vadd.f32 %v506, %v608
        %v610 = vand.u32 %v261, 4294901760
        %v611 = vsub.f32 %v261, %v610
        %612 = vmatmul.f32.gmra.mxu0 %v611
        %v613 = vpop.f32.mrf.mxu0
        %v614 = vadd.f32 %v510, %v613
        %v615 = vand.u32 %v264, 4294901760
        %v616 = vsub.f32 %v264, %v615
        %617 = vmatmul.f32.gmra.mxu0 %v616
        %v618 = vpop.f32.mrf.mxu0
        %v619 = vadd.f32 %v514, %v618
        %620 = vdwg.mxu0
        %621 = vmatpush.msra.mxu0 0.0
        %622 = vmatpush.msra.mxu0 0.0
        %623 = vmatpush.msra.mxu0 0.0
        %624 = vmatpush.msra.mxu0 0.0
        %625 = vmatpush.msra.mxu0 0.0
        %626 = vmatpush.msra.mxu0 0.0
        %627 = vmatpush.msra.mxu0 0.0
        %628 = vmatpush.msra.mxu0 0.0
        %629 = vmatpush.msra.mxu0 0.0
        %630 = vmatpush.msra.mxu0 0.0
        %631 = vmatpush.msra.mxu0 0.0
        %632 = vmatpush.msra.mxu0 0.0
        %v633 = vand.u32 %v216, 4294901760
        %634 = vmatpush.msra.mxu0 %v633
        %v635 = vand.u32 %v215, 4294901760
        %636 = vmatpush.msra.mxu0 %v635
        %v637 = vand.u32 %v214, 4294901760
        %638 = vmatpush.msra.mxu0 %v637
        %v639 = vand.u32 %v213, 4294901760
        %640 = vmatpush.msra.mxu0 %v639
        %v641 = vand.u32 %v219, 4294901760
        %v642 = vsub.f32 %v219, %v641
        %v643 = vand.u32 %v642, 4294901760
        %644 = vmatmul.f32.gmra.mxu0 %v643
        %v645 = vpop.f32.mrf.mxu0
        %v646 = vadd.f32 %v544, %v645
        %v647 = vand.u32 %v222, 4294901760
        %v648 = vsub.f32 %v222, %v647
        %v649 = vand.u32 %v648, 4294901760
        %650 = vmatmul.f32.gmra.mxu0 %v649
        %v651 = vpop.f32.mrf.mxu0
        %v652 = vadd.f32 %v549, %v651
        %v653 = vand.u32 %v225, 4294901760
        %v654 = vsub.f32 %v225, %v653
        %v655 = vand.u32 %v654, 4294901760
        %656 = vmatmul.f32.gmra.mxu0 %v655
        %v657 = vpop.f32.mrf.mxu0
        %v658 = vadd.f32 %v554, %v657
        %v659 = vand.u32 %v228, 4294901760
        %v660 = vsub.f32 %v228, %v659
        %v661 = vand.u32 %v660, 4294901760
        %662 = vmatmul.f32.gmra.mxu0 %v661
        %v663 = vpop.f32.mrf.mxu0
        %v664 = vadd.f32 %v559, %v663
        %v665 = vand.u32 %v231, 4294901760
        %v666 = vsub.f32 %v231, %v665
        %v667 = vand.u32 %v666, 4294901760
        %668 = vmatmul.f32.gmra.mxu0 %v667
        %v669 = vpop.f32.mrf.mxu0
        %v670 = vadd.f32 %v564, %v669
        %v671 = vand.u32 %v234, 4294901760
        %v672 = vsub.f32 %v234, %v671
        %v673 = vand.u32 %v672, 4294901760
        %674 = vmatmul.f32.gmra.mxu0 %v673
        %v675 = vpop.f32.mrf.mxu0
        %v676 = vadd.f32 %v569, %v675
        %v677 = vand.u32 %v237, 4294901760
        %v678 = vsub.f32 %v237, %v677
        %v679 = vand.u32 %v678, 4294901760
        %680 = vmatmul.f32.gmra.mxu0 %v679
        %v681 = vpop.f32.mrf.mxu0
        %v682 = vadd.f32 %v574, %v681
        %v683 = vand.u32 %v240, 4294901760
        %v684 = vsub.f32 %v240, %v683
        %v685 = vand.u32 %v684, 4294901760
        %686 = vmatmul.f32.gmra.mxu0 %v685
        %v687 = vpop.f32.mrf.mxu0
        %v688 = vadd.f32 %v579, %v687
        %v689 = vand.u32 %v243, 4294901760
        %v690 = vsub.f32 %v243, %v689
        %v691 = vand.u32 %v690, 4294901760
        %692 = vmatmul.f32.gmra.mxu0 %v691
        %v693 = vpop.f32.mrf.mxu0
        %v694 = vadd.f32 %v584, %v693
        %v695 = vand.u32 %v246, 4294901760
        %v696 = vsub.f32 %v246, %v695
        %v697 = vand.u32 %v696, 4294901760
        %698 = vmatmul.f32.gmra.mxu0 %v697
        %v699 = vpop.f32.mrf.mxu0
        %v700 = vadd.f32 %v589, %v699
        %v701 = vand.u32 %v249, 4294901760
        %v702 = vsub.f32 %v249, %v701
        %v703 = vand.u32 %v702, 4294901760
        %704 = vmatmul.f32.gmra.mxu0 %v703
        %v705 = vpop.f32.mrf.mxu0
        %v706 = vadd.f32 %v594, %v705
        %v707 = vand.u32 %v252, 4294901760
        %v708 = vsub.f32 %v252, %v707
        %v709 = vand.u32 %v708, 4294901760
        %710 = vmatmul.f32.gmra.mxu0 %v709
        %v711 = vpop.f32.mrf.mxu0
        %v712 = vadd.f32 %v599, %v711
        %v713 = vand.u32 %v255, 4294901760
        %v714 = vsub.f32 %v255, %v713
        %v715 = vand.u32 %v714, 4294901760
        %716 = vmatmul.f32.gmra.mxu0 %v715
        %v717 = vpop.f32.mrf.mxu0
        %v718 = vadd.f32 %v604, %v717
        %v719 = vand.u32 %v258, 4294901760
        %v720 = vsub.f32 %v258, %v719
        %v721 = vand.u32 %v720, 4294901760
        %722 = vmatmul.f32.gmra.mxu0 %v721
        %v723 = vpop.f32.mrf.mxu0
        %v724 = vadd.f32 %v609, %v723
        %v725 = vand.u32 %v261, 4294901760
        %v726 = vsub.f32 %v261, %v725
        %v727 = vand.u32 %v726, 4294901760
        %728 = vmatmul.f32.gmra.mxu0 %v727
        %v729 = vpop.f32.mrf.mxu0
        %v730 = vadd.f32 %v614, %v729
        %v731 = vand.u32 %v264, 4294901760
        %v732 = vsub.f32 %v264, %v731
        %v733 = vand.u32 %v732, 4294901760
        %734 = vmatmul.f32.gmra.mxu0 %v733
        %v735 = vpop.f32.mrf.mxu0
        %v736 = vadd.f32 %v619, %v735
        %737 = vdwg.mxu0
        %738 = vmatpush.msra.mxu0 0.0
        %739 = vmatpush.msra.mxu0 0.0
        %740 = vmatpush.msra.mxu0 0.0
        %741 = vmatpush.msra.mxu0 0.0
        %742 = vmatpush.msra.mxu0 0.0
        %743 = vmatpush.msra.mxu0 0.0
        %744 = vmatpush.msra.mxu0 0.0
        %745 = vmatpush.msra.mxu0 0.0
        %746 = vmatpush.msra.mxu0 0.0
        %747 = vmatpush.msra.mxu0 0.0
        %748 = vmatpush.msra.mxu0 0.0
        %749 = vmatpush.msra.mxu0 0.0
        %v750 = vand.u32 %v216, 4294901760
        %v751 = vsub.f32 %v216, %v750
        %v752 = vand.u32 %v751, 4294901760
        %753 = vmatpush.msra.mxu0 %v752
        %v754 = vand.u32 %v215, 4294901760
        %v755 = vsub.f32 %v215, %v754
        %v756 = vand.u32 %v755, 4294901760
        %757 = vmatpush.msra.mxu0 %v756
        %v758 = vand.u32 %v214, 4294901760
        %v759 = vsub.f32 %v214, %v758
        %v760 = vand.u32 %v759, 4294901760
        %761 = vmatpush.msra.mxu0 %v760
        %v762 = vand.u32 %v213, 4294901760
        %v763 = vsub.f32 %v213, %v762
        %v764 = vand.u32 %v763, 4294901760
        %765 = vmatpush.msra.mxu0 %v764
        %v766 = vand.u32 %v219, 4294901760
        %767 = vmatmul.f32.gmra.mxu0 %v766
        %v768 = vpop.f32.mrf.mxu0
        %v769 = vadd.f32 %v646, %v768
        %v770 = vand.u32 %v222, 4294901760
        %771 = vmatmul.f32.gmra.mxu0 %v770
        %v772 = vpop.f32.mrf.mxu0
        %v773 = vadd.f32 %v652, %v772
        %v774 = vand.u32 %v225, 4294901760
        %775 = vmatmul.f32.gmra.mxu0 %v774
        %v776 = vpop.f32.mrf.mxu0
        %v777 = vadd.f32 %v658, %v776
        %v778 = vand.u32 %v228, 4294901760
        %779 = vmatmul.f32.gmra.mxu0 %v778
        %v780 = vpop.f32.mrf.mxu0
        %v781 = vadd.f32 %v664, %v780
        %v782 = vand.u32 %v231, 4294901760
        %783 = vmatmul.f32.gmra.mxu0 %v782
        %v784 = vpop.f32.mrf.mxu0
        %v785 = vadd.f32 %v670, %v784
        %v786 = vand.u32 %v234, 4294901760
        %787 = vmatmul.f32.gmra.mxu0 %v786
        %v788 = vpop.f32.mrf.mxu0
        %v789 = vadd.f32 %v676, %v788
        %v790 = vand.u32 %v237, 4294901760
        %791 = vmatmul.f32.gmra.mxu0 %v790
        %v792 = vpop.f32.mrf.mxu0
        %v793 = vadd.f32 %v682, %v792
        %v794 = vand.u32 %v240, 4294901760
        %795 = vmatmul.f32.gmra.mxu0 %v794
        %v796 = vpop.f32.mrf.mxu0
        %v797 = vadd.f32 %v688, %v796
        %v798 = vand.u32 %v243, 4294901760
        %799 = vmatmul.f32.gmra.mxu0 %v798
        %v800 = vpop.f32.mrf.mxu0
        %v801 = vadd.f32 %v694, %v800
        %v802 = vand.u32 %v246, 4294901760
        %803 = vmatmul.f32.gmra.mxu0 %v802
        %v804 = vpop.f32.mrf.mxu0
        %v805 = vadd.f32 %v700, %v804
        %v806 = vand.u32 %v249, 4294901760
        %807 = vmatmul.f32.gmra.mxu0 %v806
        %v808 = vpop.f32.mrf.mxu0
        %v809 = vadd.f32 %v706, %v808
        %v810 = vand.u32 %v252, 4294901760
        %811 = vmatmul.f32.gmra.mxu0 %v810
        %v812 = vpop.f32.mrf.mxu0
        %v813 = vadd.f32 %v712, %v812
        %v814 = vand.u32 %v255, 4294901760
        %815 = vmatmul.f32.gmra.mxu0 %v814
        %v816 = vpop.f32.mrf.mxu0
        %v817 = vadd.f32 %v718, %v816
        %v818 = vand.u32 %v258, 4294901760
        %819 = vmatmul.f32.gmra.mxu0 %v818
        %v820 = vpop.f32.mrf.mxu0
        %v821 = vadd.f32 %v724, %v820
        %v822 = vand.u32 %v261, 4294901760
        %823 = vmatmul.f32.gmra.mxu0 %v822
        %v824 = vpop.f32.mrf.mxu0
        %v825 = vadd.f32 %v730, %v824
        %v826 = vand.u32 %v264, 4294901760
        %827 = vmatmul.f32.gmra.mxu0 %v826
        %v828 = vpop.f32.mrf.mxu0
        %v829 = vadd.f32 %v736, %v828
        %830 = vdwg.mxu0
        %831 = vmatpush.msra.mxu0 0.0
        %832 = vmatpush.msra.mxu0 0.0
        %833 = vmatpush.msra.mxu0 0.0
        %834 = vmatpush.msra.mxu0 0.0
        %835 = vmatpush.msra.mxu0 0.0
        %836 = vmatpush.msra.mxu0 0.0
        %837 = vmatpush.msra.mxu0 0.0
        %838 = vmatpush.msra.mxu0 0.0
        %839 = vmatpush.msra.mxu0 0.0
        %840 = vmatpush.msra.mxu0 0.0
        %841 = vmatpush.msra.mxu0 0.0
        %842 = vmatpush.msra.mxu0 0.0
        %v843 = vand.u32 %v216, 4294901760
        %844 = vmatpush.msra.mxu0 %v843
        %v845 = vand.u32 %v215, 4294901760
        %846 = vmatpush.msra.mxu0 %v845
        %v847 = vand.u32 %v214, 4294901760
        %848 = vmatpush.msra.mxu0 %v847
        %v849 = vand.u32 %v213, 4294901760
        %850 = vmatpush.msra.mxu0 %v849
        %v851 = vand.u32 %v219, 4294901760
        %852 = vmatmul.f32.gmra.mxu0 %v851
        %v853 = vpop.f32.mrf.mxu0
        %v854 = vadd.f32 %v769, %v853
        %v855 = vand.u32 %v222, 4294901760
        %856 = vmatmul.f32.gmra.mxu0 %v855
        %v857 = vpop.f32.mrf.mxu0
        %v858 = vadd.f32 %v773, %v857
        %v859 = vand.u32 %v225, 4294901760
        %860 = vmatmul.f32.gmra.mxu0 %v859
        %v861 = vpop.f32.mrf.mxu0
        %v862 = vadd.f32 %v777, %v861
        %v863 = vand.u32 %v228, 4294901760
        %864 = vmatmul.f32.gmra.mxu0 %v863
        %v865 = vpop.f32.mrf.mxu0
        %v866 = vadd.f32 %v781, %v865
        %v867 = vand.u32 %v231, 4294901760
        %868 = vmatmul.f32.gmra.mxu0 %v867
        %v869 = vpop.f32.mrf.mxu0
        %v870 = vadd.f32 %v785, %v869
        %v871 = vand.u32 %v234, 4294901760
        %872 = vmatmul.f32.gmra.mxu0 %v871
        %v873 = vpop.f32.mrf.mxu0
        %v874 = vadd.f32 %v789, %v873
        %v875 = vand.u32 %v237, 4294901760
        %876 = vmatmul.f32.gmra.mxu0 %v875
        %v877 = vpop.f32.mrf.mxu0
        %v878 = vadd.f32 %v793, %v877
        %v879 = vand.u32 %v240, 4294901760
        %880 = vmatmul.f32.gmra.mxu0 %v879
        %v881 = vpop.f32.mrf.mxu0
        %v882 = vadd.f32 %v797, %v881
        %v883 = vand.u32 %v243, 4294901760
        %884 = vmatmul.f32.gmra.mxu0 %v883
        %v885 = vpop.f32.mrf.mxu0
        %v886 = vadd.f32 %v801, %v885
        %v887 = vand.u32 %v246, 4294901760
        %888 = vmatmul.f32.gmra.mxu0 %v887
        %v889 = vpop.f32.mrf.mxu0
        %v890 = vadd.f32 %v805, %v889
        %v891 = vand.u32 %v249, 4294901760
        %892 = vmatmul.f32.gmra.mxu0 %v891
        %v893 = vpop.f32.mrf.mxu0
        %v894 = vadd.f32 %v809, %v893
        %v895 = vand.u32 %v252, 4294901760
        %896 = vmatmul.f32.gmra.mxu0 %v895
        %v897 = vpop.f32.mrf.mxu0
        %v898 = vadd.f32 %v813, %v897
        %v899 = vand.u32 %v255, 4294901760
        %900 = vmatmul.f32.gmra.mxu0 %v899
        %v901 = vpop.f32.mrf.mxu0
        %v902 = vadd.f32 %v817, %v901
        %v903 = vand.u32 %v258, 4294901760
        %904 = vmatmul.f32.gmra.mxu0 %v903
        %v905 = vpop.f32.mrf.mxu0
        %v906 = vadd.f32 %v821, %v905
        %v907 = vand.u32 %v261, 4294901760
        %908 = vmatmul.f32.gmra.mxu0 %v907
        %v909 = vpop.f32.mrf.mxu0
        %v910 = vadd.f32 %v825, %v909
        %v911 = vand.u32 %v264, 4294901760
        %912 = vmatmul.f32.gmra.mxu0 %v911
        %v913 = vpop.f32.mrf.mxu0
        %v914 = vadd.f32 %v829, %v913
        %915 = vdwg.mxu0
        %v916 = vmax.f32 %v854, 0.0
        %v917 = vmax.f32 %v858, 0.0
        %v918 = vmax.f32 %v862, 0.0
        %v919 = vmax.f32 %v866, 0.0
        %v920 = vmax.f32 %v870, 0.0
        %v921 = vmax.f32 %v874, 0.0
        %v922 = vmax.f32 %v878, 0.0
        %v923 = vmax.f32 %v882, 0.0
        %v924 = vmax.f32 %v886, 0.0
        %v925 = vmax.f32 %v890, 0.0
        %v926 = vmax.f32 %v894, 0.0
        %v927 = vmax.f32 %v898, 0.0
        %v928 = vmax.f32 %v902, 0.0
        %v929 = vmax.f32 %v906, 0.0
        %v930 = vmax.f32 %v910, 0.0
        %v931 = vmax.f32 %v914, 0.0
        %v932 = vld [vmem:[%s2] sm:$0xff]
        %v933 = vld [vmem:[%s2 + $0x8] sm:$0xff]
        %v934 = vld [vmem:[%s2 + $0x10] sm:$0xff]
        %v935 = vld [vmem:[%s2 + $0x18] sm:$0xff]
        %v936 = vld [vmem:[%s2 + $0x20] sm:$0xff]
        %v937 = vld [vmem:[%s2 + $0x28] sm:$0xff]
        %v938 = vld [vmem:[%s2 + $0x30] sm:$0xff]
        %v939 = vld [vmem:[%s2 + $0x38] sm:$0xff]
        %v940 = vld [vmem:[%s2 + $0x40] sm:$0xff]
        %v941 = vld [vmem:[%s2 + $0x48] sm:$0xff]
        %v942 = vld [vmem:[%s2 + $0x50] sm:$0xff]
        %v943 = vld [vmem:[%s2 + $0x58] sm:$0xff]
        %v944 = vld [vmem:[%s2 + $0x60] sm:$0xff]
        %v945 = vld [vmem:[%s2 + $0x68] sm:$0xff]
        %v946 = vld [vmem:[%s2 + $0x70] sm:$0xff]
        %v947 = vld [vmem:[%s2 + $0x78] sm:$0xff]
        %v948 = vand.u32 %v947, 4294901760
        %949 = vmatpush.msra.mxu0 %v948
        %v950 = vand.u32 %v946, 4294901760
        %951 = vmatpush.msra.mxu0 %v950
        %v952 = vand.u32 %v945, 4294901760
        %953 = vmatpush.msra.mxu0 %v952
        %v954 = vand.u32 %v944, 4294901760
        %955 = vmatpush.msra.mxu0 %v954
        %v956 = vand.u32 %v943, 4294901760
        %957 = vmatpush.msra.mxu0 %v956
        %v958 = vand.u32 %v942, 4294901760
        %959 = vmatpush.msra.mxu0 %v958
        %v960 = vand.u32 %v941, 4294901760
        %961 = vmatpush.msra.mxu0 %v960
        %v962 = vand.u32 %v940, 4294901760
        %963 = vmatpush.msra.mxu0 %v962
        %v964 = vand.u32 %v939, 4294901760
        %965 = vmatpush.msra.mxu0 %v964
        %v966 = vand.u32 %v938, 4294901760
        %967 = vmatpush.msra.mxu0 %v966
        %v968 = vand.u32 %v937, 4294901760
        %969 = vmatpush.msra.mxu0 %v968
        %v970 = vand.u32 %v936, 4294901760
        %971 = vmatpush.msra.mxu0 %v970
        %v972 = vand.u32 %v935, 4294901760
        %973 = vmatpush.msra.mxu0 %v972
        %v974 = vand.u32 %v934, 4294901760
        %975 = vmatpush.msra.mxu0 %v974
        %v976 = vand.u32 %v933, 4294901760
        %977 = vmatpush.msra.mxu0 %v976
        %v978 = vand.u32 %v932, 4294901760
        %979 = vmatpush.msra.mxu0 %v978
        %v980 = vand.u32 %v916, 4294901760
        %v981 = vsub.f32 %v916, %v980
        %v982 = vand.u32 %v981, 4294901760
        %v983 = vsub.f32 %v981, %v982
        %v984 = vand.u32 %v983, 4294901760
        %985 = vmatmul.f32.gmra.mxu0 %v984
        %v986 = vpop.f32.mrf.mxu0
        %v987 = vadd.f32 0.0, %v986
        %v988 = vand.u32 %v917, 4294901760
        %v989 = vsub.f32 %v917, %v988
        %v990 = vand.u32 %v989, 4294901760
        %v991 = vsub.f32 %v989, %v990
        %v992 = vand.u32 %v991, 4294901760
        %993 = vmatmul.f32.gmra.mxu0 %v992
        %v994 = vpop.f32.mrf.mxu0
        %v995 = vadd.f32 0.0, %v994
        %v996 = vand.u32 %v918, 4294901760
        %v997 = vsub.f32 %v918, %v996
        %v998 = vand.u32 %v997, 4294901760
        %v999 = vsub.f32 %v997, %v998
        %v1000 = vand.u32 %v999, 4294901760
        %1001 = vmatmul.f32.gmra.mxu0 %v1000
        %v1002 = vpop.f32.mrf.mxu0
        %v1003 = vadd.f32 0.0, %v1002
        %v1004 = vand.u32 %v919, 4294901760
        %v1005 = vsub.f32 %v919, %v1004
        %v1006 = vand.u32 %v1005, 4294901760
        %v1007 = vsub.f32 %v1005, %v1006
        %v1008 = vand.u32 %v1007, 4294901760
        %1009 = vmatmul.f32.gmra.mxu0 %v1008
        %v1010 = vpop.f32.mrf.mxu0
        %v1011 = vadd.f32 0.0, %v1010
        %v1012 = vand.u32 %v920, 4294901760
        %v1013 = vsub.f32 %v920, %v1012
        %v1014 = vand.u32 %v1013, 4294901760
        %v1015 = vsub.f32 %v1013, %v1014
        %v1016 = vand.u32 %v1015, 4294901760
        %1017 = vmatmul.f32.gmra.mxu0 %v1016
        %v1018 = vpop.f32.mrf.mxu0
        %v1019 = vadd.f32 0.0, %v1018
        %v1020 = vand.u32 %v921, 4294901760
        %v1021 = vsub.f32 %v921, %v1020
        %v1022 = vand.u32 %v1021, 4294901760
        %v1023 = vsub.f32 %v1021, %v1022
        %v1024 = vand.u32 %v1023, 4294901760
        %1025 = vmatmul.f32.gmra.mxu0 %v1024
        %v1026 = vpop.f32.mrf.mxu0
        %v1027 = vadd.f32 0.0, %v1026
        %v1028 = vand.u32 %v922, 4294901760
        %v1029 = vsub.f32 %v922, %v1028
        %v1030 = vand.u32 %v1029, 4294901760
        %v1031 = vsub.f32 %v1029, %v1030
        %v1032 = vand.u32 %v1031, 4294901760
        %1033 = vmatmul.f32.gmra.mxu0 %v1032
        %v1034 = vpop.f32.mrf.mxu0
        %v1035 = vadd.f32 0.0, %v1034
        %v1036 = vand.u32 %v923, 4294901760
        %v1037 = vsub.f32 %v923, %v1036
        %v1038 = vand.u32 %v1037, 4294901760
        %v1039 = vsub.f32 %v1037, %v1038
        %v1040 = vand.u32 %v1039, 4294901760
        %1041 = vmatmul.f32.gmra.mxu0 %v1040
        %v1042 = vpop.f32.mrf.mxu0
        %v1043 = vadd.f32 0.0, %v1042
        %v1044 = vand.u32 %v924, 4294901760
        %v1045 = vsub.f32 %v924, %v1044
        %v1046 = vand.u32 %v1045, 4294901760
        %v1047 = vsub.f32 %v1045, %v1046
        %v1048 = vand.u32 %v1047, 4294901760
        %1049 = vmatmul.f32.gmra.mxu0 %v1048
        %v1050 = vpop.f32.mrf.mxu0
        %v1051 = vadd.f32 0.0, %v1050
        %v1052 = vand.u32 %v925, 4294901760
        %v1053 = vsub.f32 %v925, %v1052
        %v1054 = vand.u32 %v1053, 4294901760
        %v1055 = vsub.f32 %v1053, %v1054
        %v1056 = vand.u32 %v1055, 4294901760
        %1057 = vmatmul.f32.gmra.mxu0 %v1056
        %v1058 = vpop.f32.mrf.mxu0
        %v1059 = vadd.f32 0.0, %v1058
        %v1060 = vand.u32 %v926, 4294901760
        %v1061 = vsub.f32 %v926, %v1060
        %v1062 = vand.u32 %v1061, 4294901760
        %v1063 = vsub.f32 %v1061, %v1062
        %v1064 = vand.u32 %v1063, 4294901760
        %1065 = vmatmul.f32.gmra.mxu0 %v1064
        %v1066 = vpop.f32.mrf.mxu0
        %v1067 = vadd.f32 0.0, %v1066
        %v1068 = vand.u32 %v927, 4294901760
        %v1069 = vsub.f32 %v927, %v1068
        %v1070 = vand.u32 %v1069, 4294901760
        %v1071 = vsub.f32 %v1069, %v1070
        %v1072 = vand.u32 %v1071, 4294901760
        %1073 = vmatmul.f32.gmra.mxu0 %v1072
        %v1074 = vpop.f32.mrf.mxu0
        %v1075 = vadd.f32 0.0, %v1074
        %v1076 = vand.u32 %v928, 4294901760
        %v1077 = vsub.f32 %v928, %v1076
        %v1078 = vand.u32 %v1077, 4294901760
        %v1079 = vsub.f32 %v1077, %v1078
        %v1080 = vand.u32 %v1079, 4294901760
        %1081 = vmatmul.f32.gmra.mxu0 %v1080
        %v1082 = vpop.f32.mrf.mxu0
        %v1083 = vadd.f32 0.0, %v1082
        %v1084 = vand.u32 %v929, 4294901760
        %v1085 = vsub.f32 %v929, %v1084
        %v1086 = vand.u32 %v1085, 4294901760
        %v1087 = vsub.f32 %v1085, %v1086
        %v1088 = vand.u32 %v1087, 4294901760
        %1089 = vmatmul.f32.gmra.mxu0 %v1088
        %v1090 = vpop.f32.mrf.mxu0
        %v1091 = vadd.f32 0.0, %v1090
        %v1092 = vand.u32 %v930, 4294901760
        %v1093 = vsub.f32 %v930, %v1092
        %v1094 = vand.u32 %v1093, 4294901760
        %v1095 = vsub.f32 %v1093, %v1094
        %v1096 = vand.u32 %v1095, 4294901760
        %1097 = vmatmul.f32.gmra.mxu0 %v1096
        %v1098 = vpop.f32.mrf.mxu0
        %v1099 = vadd.f32 0.0, %v1098
        %v1100 = vand.u32 %v931, 4294901760
        %v1101 = vsub.f32 %v931, %v1100
        %v1102 = vand.u32 %v1101, 4294901760
        %v1103 = vsub.f32 %v1101, %v1102
        %v1104 = vand.u32 %v1103, 4294901760
        %1105 = vmatmul.f32.gmra.mxu0 %v1104
        %v1106 = vpop.f32.mrf.mxu0
        %v1107 = vadd.f32 0.0, %v1106
        %1108 = vdwg.mxu0
        %v1109 = vand.u32 %v947, 4294901760
        %v1110 = vsub.f32 %v947, %v1109
        %v1111 = vand.u32 %v1110, 4294901760
        %v1112 = vsub.f32 %v1110, %v1111
        %v1113 = vand.u32 %v1112, 4294901760
        %1114 = vmatpush.msra.mxu0 %v1113
        %v1115 = vand.u32 %v946, 4294901760
        %v1116 = vsub.f32 %v946, %v1115
        %v1117 = vand.u32 %v1116, 4294901760
        %v1118 = vsub.f32 %v1116, %v1117
        %v1119 = vand.u32 %v1118, 4294901760
        %1120 = vmatpush.msra.mxu0 %v1119
        %v1121 = vand.u32 %v945, 4294901760
        %v1122 = vsub.f32 %v945, %v1121
        %v1123 = vand.u32 %v1122, 4294901760
        %v1124 = vsub.f32 %v1122, %v1123
        %v1125 = vand.u32 %v1124, 4294901760
        %1126 = vmatpush.msra.mxu0 %v1125
        %v1127 = vand.u32 %v944, 4294901760
        %v1128 = vsub.f32 %v944, %v1127
        %v1129 = vand.u32 %v1128, 4294901760
        %v1130 = vsub.f32 %v1128, %v1129
        %v1131 = vand.u32 %v1130, 4294901760
        %1132 = vmatpush.msra.mxu0 %v1131
        %v1133 = vand.u32 %v943, 4294901760
        %v1134 = vsub.f32 %v943, %v1133
        %v1135 = vand.u32 %v1134, 4294901760
        %v1136 = vsub.f32 %v1134, %v1135
        %v1137 = vand.u32 %v1136, 4294901760
        %1138 = vmatpush.msra.mxu0 %v1137
        %v1139 = vand.u32 %v942, 4294901760
        %v1140 = vsub.f32 %v942, %v1139
        %v1141 = vand.u32 %v1140, 4294901760
        %v1142 = vsub.f32 %v1140, %v1141
        %v1143 = vand.u32 %v1142, 4294901760
        %1144 = vmatpush.msra.mxu0 %v1143
        %v1145 = vand.u32 %v941, 4294901760
        %v1146 = vsub.f32 %v941, %v1145
        %v1147 = vand.u32 %v1146, 4294901760
        %v1148 = vsub.f32 %v1146, %v1147
        %v1149 = vand.u32 %v1148, 4294901760
        %1150 = vmatpush.msra.mxu0 %v1149
        %v1151 = vand.u32 %v940, 4294901760
        %v1152 = vsub.f32 %v940, %v1151
        %v1153 = vand.u32 %v1152, 4294901760
        %v1154 = vsub.f32 %v1152, %v1153
        %v1155 = vand.u32 %v1154, 4294901760
        %1156 = vmatpush.msra.mxu0 %v1155
        %v1157 = vand.u32 %v939, 4294901760
        %v1158 = vsub.f32 %v939, %v1157
        %v1159 = vand.u32 %v1158, 4294901760
        %v1160 = vsub.f32 %v1158, %v1159
        %v1161 = vand.u32 %v1160, 4294901760
        %1162 = vmatpush.msra.mxu0 %v1161
        %v1163 = vand.u32 %v938, 4294901760
        %v1164 = vsub.f32 %v938, %v1163
        %v1165 = vand.u32 %v1164, 4294901760
        %v1166 = vsub.f32 %v1164, %v1165
        %v1167 = vand.u32 %v1166, 4294901760
        %1168 = vmatpush.msra.mxu0 %v1167
        %v1169 = vand.u32 %v937, 4294901760
        %v1170 = vsub.f32 %v937, %v1169
        %v1171 = vand.u32 %v1170, 4294901760
        %v1172 = vsub.f32 %v1170, %v1171
        %v1173 = vand.u32 %v1172, 4294901760
        %1174 = vmatpush.msra.mxu0 %v1173
        %v1175 = vand.u32 %v936, 4294901760
        %v1176 = vsub.f32 %v936, %v1175
        %v1177 = vand.u32 %v1176, 4294901760
        %v1178 = vsub.f32 %v1176, %v1177
        %v1179 = vand.u32 %v1178, 4294901760
        %1180 = vmatpush.msra.mxu0 %v1179
        %v1181 = vand.u32 %v935, 4294901760
        %v1182 = vsub.f32 %v935, %v1181
        %v1183 = vand.u32 %v1182, 4294901760
        %v1184 = vsub.f32 %v1182, %v1183
        %v1185 = vand.u32 %v1184, 4294901760
        %1186 = vmatpush.msra.mxu0 %v1185
        %v1187 = vand.u32 %v934, 4294901760
        %v1188 = vsub.f32 %v934, %v1187
        %v1189 = vand.u32 %v1188, 4294901760
        %v1190 = vsub.f32 %v1188, %v1189
        %v1191 = vand.u32 %v1190, 4294901760
        %1192 = vmatpush.msra.mxu0 %v1191
        %v1193 = vand.u32 %v933, 4294901760
        %v1194 = vsub.f32 %v933, %v1193
        %v1195 = vand.u32 %v1194, 4294901760
        %v1196 = vsub.f32 %v1194, %v1195
        %v1197 = vand.u32 %v1196, 4294901760
        %1198 = vmatpush.msra.mxu0 %v1197
        %v1199 = vand.u32 %v932, 4294901760
        %v1200 = vsub.f32 %v932, %v1199
        %v1201 = vand.u32 %v1200, 4294901760
        %v1202 = vsub.f32 %v1200, %v1201
        %v1203 = vand.u32 %v1202, 4294901760
        %1204 = vmatpush.msra.mxu0 %v1203
        %v1205 = vand.u32 %v916, 4294901760
        %1206 = vmatmul.f32.gmra.mxu0 %v1205
        %v1207 = vpop.f32.mrf.mxu0
        %v1208 = vadd.f32 %v987, %v1207
        %v1209 = vand.u32 %v917, 4294901760
        %1210 = vmatmul.f32.gmra.mxu0 %v1209
        %v1211 = vpop.f32.mrf.mxu0
        %v1212 = vadd.f32 %v995, %v1211
        %v1213 = vand.u32 %v918, 4294901760
        %1214 = vmatmul.f32.gmra.mxu0 %v1213
        %v1215 = vpop.f32.mrf.mxu0
        %v1216 = vadd.f32 %v1003, %v1215
        %v1217 = vand.u32 %v919, 4294901760
        %1218 = vmatmul.f32.gmra.mxu0 %v1217
        %v1219 = vpop.f32.mrf.mxu0
        %v1220 = vadd.f32 %v1011, %v1219
        %v1221 = vand.u32 %v920, 4294901760
        %1222 = vmatmul.f32.gmra.mxu0 %v1221
        %v1223 = vpop.f32.mrf.mxu0
        %v1224 = vadd.f32 %v1019, %v1223
        %v1225 = vand.u32 %v921, 4294901760
        %1226 = vmatmul.f32.gmra.mxu0 %v1225
        %v1227 = vpop.f32.mrf.mxu0
        %v1228 = vadd.f32 %v1027, %v1227
        %v1229 = vand.u32 %v922, 4294901760
        %1230 = vmatmul.f32.gmra.mxu0 %v1229
        %v1231 = vpop.f32.mrf.mxu0
        %v1232 = vadd.f32 %v1035, %v1231
        %v1233 = vand.u32 %v923, 4294901760
        %1234 = vmatmul.f32.gmra.mxu0 %v1233
        %v1235 = vpop.f32.mrf.mxu0
        %v1236 = vadd.f32 %v1043, %v1235
        %v1237 = vand.u32 %v924, 4294901760
        %1238 = vmatmul.f32.gmra.mxu0 %v1237
        %v1239 = vpop.f32.mrf.mxu0
        %v1240 = vadd.f32 %v1051, %v1239
        %v1241 = vand.u32 %v925, 4294901760
        %1242 = vmatmul.f32.gmra.mxu0 %v1241
        %v1243 = vpop.f32.mrf.mxu0
        %v1244 = vadd.f32 %v1059, %v1243
        %v1245 = vand.u32 %v926, 4294901760
        %1246 = vmatmul.f32.gmra.mxu0 %v1245
        %v1247 = vpop.f32.mrf.mxu0
        %v1248 = vadd.f32 %v1067, %v1247
        %v1249 = vand.u32 %v927, 4294901760
        %1250 = vmatmul.f32.gmra.mxu0 %v1249
        %v1251 = vpop.f32.mrf.mxu0
        %v1252 = vadd.f32 %v1075, %v1251
        %v1253 = vand.u32 %v928, 4294901760
        %1254 = vmatmul.f32.gmra.mxu0 %v1253
        %v1255 = vpop.f32.mrf.mxu0
        %v1256 = vadd.f32 %v1083, %v1255
        %v1257 = vand.u32 %v929, 4294901760
        %1258 = vmatmul.f32.gmra.mxu0 %v1257
        %v1259 = vpop.f32.mrf.mxu0
        %v1260 = vadd.f32 %v1091, %v1259
        %v1261 = vand.u32 %v930, 4294901760
        %1262 = vmatmul.f32.gmra.mxu0 %v1261
        %v1263 = vpop.f32.mrf.mxu0
        %v1264 = vadd.f32 %v1099, %v1263
        %v1265 = vand.u32 %v931, 4294901760
        %1266 = vmatmul.f32.gmra.mxu0 %v1265
        %v1267 = vpop.f32.mrf.mxu0
        %v1268 = vadd.f32 %v1107, %v1267
        %1269 = vdwg.mxu0
        %v1270 = vand.u32 %v947, 4294901760
        %v1271 = vsub.f32 %v947, %v1270
        %1272 = vmatpush.msra.mxu0 %v1271
        %v1273 = vand.u32 %v946, 4294901760
        %v1274 = vsub.f32 %v946, %v1273
        %1275 = vmatpush.msra.mxu0 %v1274
        %v1276 = vand.u32 %v945, 4294901760
        %v1277 = vsub.f32 %v945, %v1276
        %1278 = vmatpush.msra.mxu0 %v1277
        %v1279 = vand.u32 %v944, 4294901760
        %v1280 = vsub.f32 %v944, %v1279
        %1281 = vmatpush.msra.mxu0 %v1280
        %v1282 = vand.u32 %v943, 4294901760
        %v1283 = vsub.f32 %v943, %v1282
        %1284 = vmatpush.msra.mxu0 %v1283
        %v1285 = vand.u32 %v942, 4294901760
        %v1286 = vsub.f32 %v942, %v1285
        %1287 = vmatpush.msra.mxu0 %v1286
        %v1288 = vand.u32 %v941, 4294901760
        %v1289 = vsub.f32 %v941, %v1288
        %1290 = vmatpush.msra.mxu0 %v1289
        %v1291 = vand.u32 %v940, 4294901760
        %v1292 = vsub.f32 %v940, %v1291
        %1293 = vmatpush.msra.mxu0 %v1292
        %v1294 = vand.u32 %v939, 4294901760
        %v1295 = vsub.f32 %v939, %v1294
        %1296 = vmatpush.msra.mxu0 %v1295
        %v1297 = vand.u32 %v938, 4294901760
        %v1298 = vsub.f32 %v938, %v1297
        %1299 = vmatpush.msra.mxu0 %v1298
        %v1300 = vand.u32 %v937, 4294901760
        %v1301 = vsub.f32 %v937, %v1300
        %1302 = vmatpush.msra.mxu0 %v1301
        %v1303 = vand.u32 %v936, 4294901760
        %v1304 = vsub.f32 %v936, %v1303
        %1305 = vmatpush.msra.mxu0 %v1304
        %v1306 = vand.u32 %v935, 4294901760
        %v1307 = vsub.f32 %v935, %v1306
        %1308 = vmatpush.msra.mxu0 %v1307
        %v1309 = vand.u32 %v934, 4294901760
        %v1310 = vsub.f32 %v934, %v1309
        %1311 = vmatpush.msra.mxu0 %v1310
        %v1312 = vand.u32 %v933, 4294901760
        %v1313 = vsub.f32 %v933, %v1312
        %1314 = vmatpush.msra.mxu0 %v1313
        %v1315 = vand.u32 %v932, 4294901760
        %v1316 = vsub.f32 %v932, %v1315
        %1317 = vmatpush.msra.mxu0 %v1316
        %v1318 = vand.u32 %v916, 4294901760
        %v1319 = vsub.f32 %v916, %v1318
        %1320 = vmatmul.f32.gmra.mxu0 %v1319
        %v1321 = vpop.f32.mrf.mxu0
        %v1322 = vadd.f32 %v1208, %v1321
        %v1323 = vand.u32 %v917, 4294901760
        %v1324 = vsub.f32 %v917, %v1323
        %1325 = vmatmul.f32.gmra.mxu0 %v1324
        %v1326 = vpop.f32.mrf.mxu0
        %v1327 = vadd.f32 %v1212, %v1326
        %v1328 = vand.u32 %v918, 4294901760
        %v1329 = vsub.f32 %v918, %v1328
        %1330 = vmatmul.f32.gmra.mxu0 %v1329
        %v1331 = vpop.f32.mrf.mxu0
        %v1332 = vadd.f32 %v1216, %v1331
        %v1333 = vand.u32 %v919, 4294901760
        %v1334 = vsub.f32 %v919, %v1333
        %1335 = vmatmul.f32.gmra.mxu0 %v1334
        %v1336 = vpop.f32.mrf.mxu0
        %v1337 = vadd.f32 %v1220, %v1336
        %v1338 = vand.u32 %v920, 4294901760
        %v1339 = vsub.f32 %v920, %v1338
        %1340 = vmatmul.f32.gmra.mxu0 %v1339
        %v1341 = vpop.f32.mrf.mxu0
        %v1342 = vadd.f32 %v1224, %v1341
        %v1343 = vand.u32 %v921, 4294901760
        %v1344 = vsub.f32 %v921, %v1343
        %1345 = vmatmul.f32.gmra.mxu0 %v1344
        %v1346 = vpop.f32.mrf.mxu0
        %v1347 = vadd.f32 %v1228, %v1346
        %v1348 = vand.u32 %v922, 4294901760
        %v1349 = vsub.f32 %v922, %v1348
        %1350 = vmatmul.f32.gmra.mxu0 %v1349
        %v1351 = vpop.f32.mrf.mxu0
        %v1352 = vadd.f32 %v1232, %v1351
        %v1353 = vand.u32 %v923, 4294901760
        %v1354 = vsub.f32 %v923, %v1353
        %1355 = vmatmul.f32.gmra.mxu0 %v1354
        %v1356 = vpop.f32.mrf.mxu0
        %v1357 = vadd.f32 %v1236, %v1356
        %v1358 = vand.u32 %v924, 4294901760
        %v1359 = vsub.f32 %v924, %v1358
        %1360 = vmatmul.f32.gmra.mxu0 %v1359
        %v1361 = vpop.f32.mrf.mxu0
        %v1362 = vadd.f32 %v1240, %v1361
        %v1363 = vand.u32 %v925, 4294901760
        %v1364 = vsub.f32 %v925, %v1363
        %1365 = vmatmul.f32.gmra.mxu0 %v1364
        %v1366 = vpop.f32.mrf.mxu0
        %v1367 = vadd.f32 %v1244, %v1366
        %v1368 = vand.u32 %v926, 4294901760
        %v1369 = vsub.f32 %v926, %v1368
        %1370 = vmatmul.f32.gmra.mxu0 %v1369
        %v1371 = vpop.f32.mrf.mxu0
        %v1372 = vadd.f32 %v1248, %v1371
        %v1373 = vand.u32 %v927, 4294901760
        %v1374 = vsub.f32 %v927, %v1373
        %1375 = vmatmul.f32.gmra.mxu0 %v1374
        %v1376 = vpop.f32.mrf.mxu0
        %v1377 = vadd.f32 %v1252, %v1376
        %v1378 = vand.u32 %v928, 4294901760
        %v1379 = vsub.f32 %v928, %v1378
        %1380 = vmatmul.f32.gmra.mxu0 %v1379
        %v1381 = vpop.f32.mrf.mxu0
        %v1382 = vadd.f32 %v1256, %v1381
        %v1383 = vand.u32 %v929, 4294901760
        %v1384 = vsub.f32 %v929, %v1383
        %1385 = vmatmul.f32.gmra.mxu0 %v1384
        %v1386 = vpop.f32.mrf.mxu0
        %v1387 = vadd.f32 %v1260, %v1386
        %v1388 = vand.u32 %v930, 4294901760
        %v1389 = vsub.f32 %v930, %v1388
        %1390 = vmatmul.f32.gmra.mxu0 %v1389
        %v1391 = vpop.f32.mrf.mxu0
        %v1392 = vadd.f32 %v1264, %v1391
        %v1393 = vand.u32 %v931, 4294901760
        %v1394 = vsub.f32 %v931, %v1393
        %1395 = vmatmul.f32.gmra.mxu0 %v1394
        %v1396 = vpop.f32.mrf.mxu0
        %v1397 = vadd.f32 %v1268, %v1396
        %1398 = vdwg.mxu0
        %v1399 = vand.u32 %v947, 4294901760
        %1400 = vmatpush.msra.mxu0 %v1399
        %v1401 = vand.u32 %v946, 4294901760
        %1402 = vmatpush.msra.mxu0 %v1401
        %v1403 = vand.u32 %v945, 4294901760
        %1404 = vmatpush.msra.mxu0 %v1403
        %v1405 = vand.u32 %v944, 4294901760
        %1406 = vmatpush.msra.mxu0 %v1405
        %v1407 = vand.u32 %v943, 4294901760
        %1408 = vmatpush.msra.mxu0 %v1407
        %v1409 = vand.u32 %v942, 4294901760
        %1410 = vmatpush.msra.mxu0 %v1409
        %v1411 = vand.u32 %v941, 4294901760
        %1412 = vmatpush.msra.mxu0 %v1411
        %v1413 = vand.u32 %v940, 4294901760
        %1414 = vmatpush.msra.mxu0 %v1413
        %v1415 = vand.u32 %v939, 4294901760
        %1416 = vmatpush.msra.mxu0 %v1415
        %v1417 = vand.u32 %v938, 4294901760
        %1418 = vmatpush.msra.mxu0 %v1417
        %v1419 = vand.u32 %v937, 4294901760
        %1420 = vmatpush.msra.mxu0 %v1419
        %v1421 = vand.u32 %v936, 4294901760
        %1422 = vmatpush.msra.mxu0 %v1421
        %v1423 = vand.u32 %v935, 4294901760
        %1424 = vmatpush.msra.mxu0 %v1423
        %v1425 = vand.u32 %v934, 4294901760
        %1426 = vmatpush.msra.mxu0 %v1425
        %v1427 = vand.u32 %v933, 4294901760
        %1428 = vmatpush.msra.mxu0 %v1427
        %v1429 = vand.u32 %v932, 4294901760
        %1430 = vmatpush.msra.mxu0 %v1429
        %v1431 = vand.u32 %v916, 4294901760
        %v1432 = vsub.f32 %v916, %v1431
        %v1433 = vand.u32 %v1432, 4294901760
        %1434 = vmatmul.f32.gmra.mxu0 %v1433
        %v1435 = vpop.f32.mrf.mxu0
        %v1436 = vadd.f32 %v1322, %v1435
        %v1437 = vand.u32 %v917, 4294901760
        %v1438 = vsub.f32 %v917, %v1437
        %v1439 = vand.u32 %v1438, 4294901760
        %1440 = vmatmul.f32.gmra.mxu0 %v1439
        %v1441 = vpop.f32.mrf.mxu0
        %v1442 = vadd.f32 %v1327, %v1441
        %v1443 = vand.u32 %v918, 4294901760
        %v1444 = vsub.f32 %v918, %v1443
        %v1445 = vand.u32 %v1444, 4294901760
        %1446 = vmatmul.f32.gmra.mxu0 %v1445
        %v1447 = vpop.f32.mrf.mxu0
        %v1448 = vadd.f32 %v1332, %v1447
        %v1449 = vand.u32 %v919, 4294901760
        %v1450 = vsub.f32 %v919, %v1449
        %v1451 = vand.u32 %v1450, 4294901760
        %1452 = vmatmul.f32.gmra.mxu0 %v1451
        %v1453 = vpop.f32.mrf.mxu0
        %v1454 = vadd.f32 %v1337, %v1453
        %v1455 = vand.u32 %v920, 4294901760
        %v1456 = vsub.f32 %v920, %v1455
        %v1457 = vand.u32 %v1456, 4294901760
        %1458 = vmatmul.f32.gmra.mxu0 %v1457
        %v1459 = vpop.f32.mrf.mxu0
        %v1460 = vadd.f32 %v1342, %v1459
        %v1461 = vand.u32 %v921, 4294901760
        %v1462 = vsub.f32 %v921, %v1461
        %v1463 = vand.u32 %v1462, 4294901760
        %1464 = vmatmul.f32.gmra.mxu0 %v1463
        %v1465 = vpop.f32.mrf.mxu0
        %v1466 = vadd.f32 %v1347, %v1465
        %v1467 = vand.u32 %v922, 4294901760
        %v1468 = vsub.f32 %v922, %v1467
        %v1469 = vand.u32 %v1468, 4294901760
        %1470 = vmatmul.f32.gmra.mxu0 %v1469
        %v1471 = vpop.f32.mrf.mxu0
        %v1472 = vadd.f32 %v1352, %v1471
        %v1473 = vand.u32 %v923, 4294901760
        %v1474 = vsub.f32 %v923, %v1473
        %v1475 = vand.u32 %v1474, 4294901760
        %1476 = vmatmul.f32.gmra.mxu0 %v1475
        %v1477 = vpop.f32.mrf.mxu0
        %v1478 = vadd.f32 %v1357, %v1477
        %v1479 = vand.u32 %v924, 4294901760
        %v1480 = vsub.f32 %v924, %v1479
        %v1481 = vand.u32 %v1480, 4294901760
        %1482 = vmatmul.f32.gmra.mxu0 %v1481
        %v1483 = vpop.f32.mrf.mxu0
        %v1484 = vadd.f32 %v1362, %v1483
        %v1485 = vand.u32 %v925, 4294901760
        %v1486 = vsub.f32 %v925, %v1485
        %v1487 = vand.u32 %v1486, 4294901760
        %1488 = vmatmul.f32.gmra.mxu0 %v1487
        %v1489 = vpop.f32.mrf.mxu0
        %v1490 = vadd.f32 %v1367, %v1489
        %v1491 = vand.u32 %v926, 4294901760
        %v1492 = vsub.f32 %v926, %v1491
        %v1493 = vand.u32 %v1492, 4294901760
        %1494 = vmatmul.f32.gmra.mxu0 %v1493
        %v1495 = vpop.f32.mrf.mxu0
        %v1496 = vadd.f32 %v1372, %v1495
        %v1497 = vand.u32 %v927, 4294901760
        %v1498 = vsub.f32 %v927, %v1497
        %v1499 = vand.u32 %v1498, 4294901760
        %1500 = vmatmul.f32.gmra.mxu0 %v1499
        %v1501 = vpop.f32.mrf.mxu0
        %v1502 = vadd.f32 %v1377, %v1501
        %v1503 = vand.u32 %v928, 4294901760
        %v1504 = vsub.f32 %v928, %v1503
        %v1505 = vand.u32 %v1504, 4294901760
        %1506 = vmatmul.f32.gmra.mxu0 %v1505
        %v1507 = vpop.f32.mrf.mxu0
        %v1508 = vadd.f32 %v1382, %v1507
        %v1509 = vand.u32 %v929, 4294901760
        %v1510 = vsub.f32 %v929, %v1509
        %v1511 = vand.u32 %v1510, 4294901760
        %1512 = vmatmul.f32.gmra.mxu0 %v1511
        %v1513 = vpop.f32.mrf.mxu0
        %v1514 = vadd.f32 %v1387, %v1513
        %v1515 = vand.u32 %v930, 4294901760
        %v1516 = vsub.f32 %v930, %v1515
        %v1517 = vand.u32 %v1516, 4294901760
        %1518 = vmatmul.f32.gmra.mxu0 %v1517
        %v1519 = vpop.f32.mrf.mxu0
        %v1520 = vadd.f32 %v1392, %v1519
        %v1521 = vand.u32 %v931, 4294901760
        %v1522 = vsub.f32 %v931, %v1521
        %v1523 = vand.u32 %v1522, 4294901760
        %1524 = vmatmul.f32.gmra.mxu0 %v1523
        %v1525 = vpop.f32.mrf.mxu0
        %v1526 = vadd.f32 %v1397, %v1525
        %1527 = vdwg.mxu0
        %v1528 = vand.u32 %v947, 4294901760
        %v1529 = vsub.f32 %v947, %v1528
        %v1530 = vand.u32 %v1529, 4294901760
        %1531 = vmatpush.msra.mxu0 %v1530
        %v1532 = vand.u32 %v946, 4294901760
        %v1533 = vsub.f32 %v946, %v1532
        %v1534 = vand.u32 %v1533, 4294901760
        %1535 = vmatpush.msra.mxu0 %v1534
        %v1536 = vand.u32 %v945, 4294901760
        %v1537 = vsub.f32 %v945, %v1536
        %v1538 = vand.u32 %v1537, 4294901760
        %1539 = vmatpush.msra.mxu0 %v1538
        %v1540 = vand.u32 %v944, 4294901760
        %v1541 = vsub.f32 %v944, %v1540
        %v1542 = vand.u32 %v1541, 4294901760
        %1543 = vmatpush.msra.mxu0 %v1542
        %v1544 = vand.u32 %v943, 4294901760
        %v1545 = vsub.f32 %v943, %v1544
        %v1546 = vand.u32 %v1545, 4294901760
        %1547 = vmatpush.msra.mxu0 %v1546
        %v1548 = vand.u32 %v942, 4294901760
        %v1549 = vsub.f32 %v942, %v1548
        %v1550 = vand.u32 %v1549, 4294901760
        %1551 = vmatpush.msra.mxu0 %v1550
        %v1552 = vand.u32 %v941, 4294901760
        %v1553 = vsub.f32 %v941, %v1552
        %v1554 = vand.u32 %v1553, 4294901760
        %1555 = vmatpush.msra.mxu0 %v1554
        %v1556 = vand.u32 %v940, 4294901760
        %v1557 = vsub.f32 %v940, %v1556
        %v1558 = vand.u32 %v1557, 4294901760
        %1559 = vmatpush.msra.mxu0 %v1558
        %v1560 = vand.u32 %v939, 4294901760
        %v1561 = vsub.f32 %v939, %v1560
        %v1562 = vand.u32 %v1561, 4294901760
        %1563 = vmatpush.msra.mxu0 %v1562
        %v1564 = vand.u32 %v938, 4294901760
        %v1565 = vsub.f32 %v938, %v1564
        %v1566 = vand.u32 %v1565, 4294901760
        %1567 = vmatpush.msra.mxu0 %v1566
        %v1568 = vand.u32 %v937, 4294901760
        %v1569 = vsub.f32 %v937, %v1568
        %v1570 = vand.u32 %v1569, 4294901760
        %1571 = vmatpush.msra.mxu0 %v1570
        %v1572 = vand.u32 %v936, 4294901760
        %v1573 = vsub.f32 %v936, %v1572
        %v1574 = vand.u32 %v1573, 4294901760
        %1575 = vmatpush.msra.mxu0 %v1574
        %v1576 = vand.u32 %v935, 4294901760
        %v1577 = vsub.f32 %v935, %v1576
        %v1578 = vand.u32 %v1577, 4294901760
        %1579 = vmatpush.msra.mxu0 %v1578
        %v1580 = vand.u32 %v934, 4294901760
        %v1581 = vsub.f32 %v934, %v1580
        %v1582 = vand.u32 %v1581, 4294901760
        %1583 = vmatpush.msra.mxu0 %v1582
        %v1584 = vand.u32 %v933, 4294901760
        %v1585 = vsub.f32 %v933, %v1584
        %v1586 = vand.u32 %v1585, 4294901760
        %1587 = vmatpush.msra.mxu0 %v1586
        %v1588 = vand.u32 %v932, 4294901760
        %v1589 = vsub.f32 %v932, %v1588
        %v1590 = vand.u32 %v1589, 4294901760
        %1591 = vmatpush.msra.mxu0 %v1590
        %v1592 = vand.u32 %v916, 4294901760
        %1593 = vmatmul.f32.gmra.mxu0 %v1592
        %v1594 = vpop.f32.mrf.mxu0
        %v1595 = vadd.f32 %v1436, %v1594
        %v1596 = vand.u32 %v917, 4294901760
        %1597 = vmatmul.f32.gmra.mxu0 %v1596
        %v1598 = vpop.f32.mrf.mxu0
        %v1599 = vadd.f32 %v1442, %v1598
        %v1600 = vand.u32 %v918, 4294901760
        %1601 = vmatmul.f32.gmra.mxu0 %v1600
        %v1602 = vpop.f32.mrf.mxu0
        %v1603 = vadd.f32 %v1448, %v1602
        %v1604 = vand.u32 %v919, 4294901760
        %1605 = vmatmul.f32.gmra.mxu0 %v1604
        %v1606 = vpop.f32.mrf.mxu0
        %v1607 = vadd.f32 %v1454, %v1606
        %v1608 = vand.u32 %v920, 4294901760
        %1609 = vmatmul.f32.gmra.mxu0 %v1608
        %v1610 = vpop.f32.mrf.mxu0
        %v1611 = vadd.f32 %v1460, %v1610
        %v1612 = vand.u32 %v921, 4294901760
        %1613 = vmatmul.f32.gmra.mxu0 %v1612
        %v1614 = vpop.f32.mrf.mxu0
        %v1615 = vadd.f32 %v1466, %v1614
        %v1616 = vand.u32 %v922, 4294901760
        %1617 = vmatmul.f32.gmra.mxu0 %v1616
        %v1618 = vpop.f32.mrf.mxu0
        %v1619 = vadd.f32 %v1472, %v1618
        %v1620 = vand.u32 %v923, 4294901760
        %1621 = vmatmul.f32.gmra.mxu0 %v1620
        %v1622 = vpop.f32.mrf.mxu0
        %v1623 = vadd.f32 %v1478, %v1622
        %v1624 = vand.u32 %v924, 4294901760
        %1625 = vmatmul.f32.gmra.mxu0 %v1624
        %v1626 = vpop.f32.mrf.mxu0
        %v1627 = vadd.f32 %v1484, %v1626
        %v1628 = vand.u32 %v925, 4294901760
        %1629 = vmatmul.f32.gmra.mxu0 %v1628
        %v1630 = vpop.f32.mrf.mxu0
        %v1631 = vadd.f32 %v1490, %v1630
        %v1632 = vand.u32 %v926, 4294901760
        %1633 = vmatmul.f32.gmra.mxu0 %v1632
        %v1634 = vpop.f32.mrf.mxu0
        %v1635 = vadd.f32 %v1496, %v1634
        %v1636 = vand.u32 %v927, 4294901760
        %1637 = vmatmul.f32.gmra.mxu0 %v1636
        %v1638 = vpop.f32.mrf.mxu0
        %v1639 = vadd.f32 %v1502, %v1638
        %v1640 = vand.u32 %v928, 4294901760
        %1641 = vmatmul.f32.gmra.mxu0 %v1640
        %v1642 = vpop.f32.mrf.mxu0
        %v1643 = vadd.f32 %v1508, %v1642
        %v1644 = vand.u32 %v929, 4294901760
        %1645 = vmatmul.f32.gmra.mxu0 %v1644
        %v1646 = vpop.f32.mrf.mxu0
        %v1647 = vadd.f32 %v1514, %v1646
        %v1648 = vand.u32 %v930, 4294901760
        %1649 = vmatmul.f32.gmra.mxu0 %v1648
        %v1650 = vpop.f32.mrf.mxu0
        %v1651 = vadd.f32 %v1520, %v1650
        %v1652 = vand.u32 %v931, 4294901760
        %1653 = vmatmul.f32.gmra.mxu0 %v1652
        %v1654 = vpop.f32.mrf.mxu0
        %v1655 = vadd.f32 %v1526, %v1654
        %1656 = vdwg.mxu0
        %v1657 = vand.u32 %v947, 4294901760
        %1658 = vmatpush.msra.mxu0 %v1657
        %v1659 = vand.u32 %v946, 4294901760
        %1660 = vmatpush.msra.mxu0 %v1659
        %v1661 = vand.u32 %v945, 4294901760
        %1662 = vmatpush.msra.mxu0 %v1661
        %v1663 = vand.u32 %v944, 4294901760
        %1664 = vmatpush.msra.mxu0 %v1663
        %v1665 = vand.u32 %v943, 4294901760
        %1666 = vmatpush.msra.mxu0 %v1665
        %v1667 = vand.u32 %v942, 4294901760
        %1668 = vmatpush.msra.mxu0 %v1667
        %v1669 = vand.u32 %v941, 4294901760
        %1670 = vmatpush.msra.mxu0 %v1669
        %v1671 = vand.u32 %v940, 4294901760
        %1672 = vmatpush.msra.mxu0 %v1671
        %v1673 = vand.u32 %v939, 4294901760
        %1674 = vmatpush.msra.mxu0 %v1673
        %v1675 = vand.u32 %v938, 4294901760
        %1676 = vmatpush.msra.mxu0 %v1675
        %v1677 = vand.u32 %v937, 4294901760
        %1678 = vmatpush.msra.mxu0 %v1677
        %v1679 = vand.u32 %v936, 4294901760
        %1680 = vmatpush.msra.mxu0 %v1679
        %v1681 = vand.u32 %v935, 4294901760
        %1682 = vmatpush.msra.mxu0 %v1681
        %v1683 = vand.u32 %v934, 4294901760
        %1684 = vmatpush.msra.mxu0 %v1683
        %v1685 = vand.u32 %v933, 4294901760
        %1686 = vmatpush.msra.mxu0 %v1685
        %v1687 = vand.u32 %v932, 4294901760
        %1688 = vmatpush.msra.mxu0 %v1687
        %v1689 = vand.u32 %v916, 4294901760
        %1690 = vmatmul.f32.gmra.mxu0 %v1689
        %v1691 = vpop.f32.mrf.mxu0
        %v1692 = vadd.f32 %v1595, %v1691
        %v1693 = vand.u32 %v917, 4294901760
        %1694 = vmatmul.f32.gmra.mxu0 %v1693
        %v1695 = vpop.f32.mrf.mxu0
        %v1696 = vadd.f32 %v1599, %v1695
        %v1697 = vand.u32 %v918, 4294901760
        %1698 = vmatmul.f32.gmra.mxu0 %v1697
        %v1699 = vpop.f32.mrf.mxu0
        %v1700 = vadd.f32 %v1603, %v1699
        %v1701 = vand.u32 %v919, 4294901760
        %1702 = vmatmul.f32.gmra.mxu0 %v1701
        %v1703 = vpop.f32.mrf.mxu0
        %v1704 = vadd.f32 %v1607, %v1703
        %v1705 = vand.u32 %v920, 4294901760
        %1706 = vmatmul.f32.gmra.mxu0 %v1705
        %v1707 = vpop.f32.mrf.mxu0
        %v1708 = vadd.f32 %v1611, %v1707
        %v1709 = vand.u32 %v921, 4294901760
        %1710 = vmatmul.f32.gmra.mxu0 %v1709
        %v1711 = vpop.f32.mrf.mxu0
        %v1712 = vadd.f32 %v1615, %v1711
        %v1713 = vand.u32 %v922, 4294901760
        %1714 = vmatmul.f32.gmra.mxu0 %v1713
        %v1715 = vpop.f32.mrf.mxu0
        %v1716 = vadd.f32 %v1619, %v1715
        %v1717 = vand.u32 %v923, 4294901760
        %1718 = vmatmul.f32.gmra.mxu0 %v1717
        %v1719 = vpop.f32.mrf.mxu0
        %v1720 = vadd.f32 %v1623, %v1719
        %v1721 = vand.u32 %v924, 4294901760
        %1722 = vmatmul.f32.gmra.mxu0 %v1721
        %v1723 = vpop.f32.mrf.mxu0
        %v1724 = vadd.f32 %v1627, %v1723
        %v1725 = vand.u32 %v925, 4294901760
        %1726 = vmatmul.f32.gmra.mxu0 %v1725
        %v1727 = vpop.f32.mrf.mxu0
        %v1728 = vadd.f32 %v1631, %v1727
        %v1729 = vand.u32 %v926, 4294901760
        %1730 = vmatmul.f32.gmra.mxu0 %v1729
        %v1731 = vpop.f32.mrf.mxu0
        %v1732 = vadd.f32 %v1635, %v1731
        %v1733 = vand.u32 %v927, 4294901760
        %1734 = vmatmul.f32.gmra.mxu0 %v1733
        %v1735 = vpop.f32.mrf.mxu0
        %v1736 = vadd.f32 %v1639, %v1735
        %v1737 = vand.u32 %v928, 4294901760
        %1738 = vmatmul.f32.gmra.mxu0 %v1737
        %v1739 = vpop.f32.mrf.mxu0
        %v1740 = vadd.f32 %v1643, %v1739
        %v1741 = vand.u32 %v929, 4294901760
        %1742 = vmatmul.f32.gmra.mxu0 %v1741
        %v1743 = vpop.f32.mrf.mxu0
        %v1744 = vadd.f32 %v1647, %v1743
        %v1745 = vand.u32 %v930, 4294901760
        %1746 = vmatmul.f32.gmra.mxu0 %v1745
        %v1747 = vpop.f32.mrf.mxu0
        %v1748 = vadd.f32 %v1651, %v1747
        %v1749 = vand.u32 %v931, 4294901760
        %1750 = vmatmul.f32.gmra.mxu0 %v1749
        %v1751 = vpop.f32.mrf.mxu0
        %v1752 = vadd.f32 %v1655, %v1751
        %1753 = vdwg.mxu0
        %v1754 = vmax.f32 %v1692, 0.0
        %v1755 = vmax.f32 %v1696, 0.0
        %v1756 = vmax.f32 %v1700, 0.0
        %v1757 = vmax.f32 %v1704, 0.0
        %v1758 = vmax.f32 %v1708, 0.0
        %v1759 = vmax.f32 %v1712, 0.0
        %v1760 = vmax.f32 %v1716, 0.0
        %v1761 = vmax.f32 %v1720, 0.0
        %v1762 = vmax.f32 %v1724, 0.0
        %v1763 = vmax.f32 %v1728, 0.0
        %v1764 = vmax.f32 %v1732, 0.0
        %v1765 = vmax.f32 %v1736, 0.0
        %v1766 = vmax.f32 %v1740, 0.0
        %v1767 = vmax.f32 %v1744, 0.0
        %v1768 = vmax.f32 %v1748, 0.0
        %v1769 = vmax.f32 %v1752, 0.0
        %v1770 = vld [vmem:[%s3] sm:$0x1]
        %v1771 = vand.u32 %v1769, 4294901760
        %1772 = vmatpush.xpose.msra.mxu0 %v1771
        %v1773 = vand.u32 %v1768, 4294901760
        %1774 = vmatpush.xpose.msra.mxu0 %v1773
        %v1775 = vand.u32 %v1767, 4294901760
        %1776 = vmatpush.xpose.msra.mxu0 %v1775
        %v1777 = vand.u32 %v1766, 4294901760
        %1778 = vmatpush.xpose.msra.mxu0 %v1777
        %v1779 = vand.u32 %v1765, 4294901760
        %1780 = vmatpush.xpose.msra.mxu0 %v1779
        %v1781 = vand.u32 %v1764, 4294901760
        %1782 = vmatpush.xpose.msra.mxu0 %v1781
        %v1783 = vand.u32 %v1763, 4294901760
        %1784 = vmatpush.xpose.msra.mxu0 %v1783
        %v1785 = vand.u32 %v1762, 4294901760
        %1786 = vmatpush.xpose.msra.mxu0 %v1785
        %v1787 = vand.u32 %v1761, 4294901760
        %1788 = vmatpush.xpose.msra.mxu0 %v1787
        %v1789 = vand.u32 %v1760, 4294901760
        %1790 = vmatpush.xpose.msra.mxu0 %v1789
        %v1791 = vand.u32 %v1759, 4294901760
        %1792 = vmatpush.xpose.msra.mxu0 %v1791
        %v1793 = vand.u32 %v1758, 4294901760
        %1794 = vmatpush.xpose.msra.mxu0 %v1793
        %v1795 = vand.u32 %v1757, 4294901760
        %1796 = vmatpush.xpose.msra.mxu0 %v1795
        %v1797 = vand.u32 %v1756, 4294901760
        %1798 = vmatpush.xpose.msra.mxu0 %v1797
        %v1799 = vand.u32 %v1755, 4294901760
        %1800 = vmatpush.xpose.msra.mxu0 %v1799
        %v1801 = vand.u32 %v1754, 4294901760
        %1802 = vmatpush.xpose.msra.mxu0 %v1801
        %v1803 = vand.u32 %v1770, 4294901760
        %v1804 = vsub.f32 %v1770, %v1803
        %v1805 = vand.u32 %v1804, 4294901760
        %v1806 = vsub.f32 %v1804, %v1805
        %v1807 = vand.u32 %v1806, 4294901760
        %1808 = vmatmul.f32.gmra.mxu0 %v1807
        %v1809 = vpop.f32.mrf.mxu0
        %v1810 = vadd.f32 0.0, %v1809
        %1811 = vdwg.mxu0
        %v1812 = vand.u32 %v1769, 4294901760
        %v1813 = vsub.f32 %v1769, %v1812
        %v1814 = vand.u32 %v1813, 4294901760
        %v1815 = vsub.f32 %v1813, %v1814
        %v1816 = vand.u32 %v1815, 4294901760
        %1817 = vmatpush.xpose.msra.mxu0 %v1816
        %v1818 = vand.u32 %v1768, 4294901760
        %v1819 = vsub.f32 %v1768, %v1818
        %v1820 = vand.u32 %v1819, 4294901760
        %v1821 = vsub.f32 %v1819, %v1820
        %v1822 = vand.u32 %v1821, 4294901760
        %1823 = vmatpush.xpose.msra.mxu0 %v1822
        %v1824 = vand.u32 %v1767, 4294901760
        %v1825 = vsub.f32 %v1767, %v1824
        %v1826 = vand.u32 %v1825, 4294901760
        %v1827 = vsub.f32 %v1825, %v1826
        %v1828 = vand.u32 %v1827, 4294901760
        %1829 = vmatpush.xpose.msra.mxu0 %v1828
        %v1830 = vand.u32 %v1766, 4294901760
        %v1831 = vsub.f32 %v1766, %v1830
        %v1832 = vand.u32 %v1831, 4294901760
        %v1833 = vsub.f32 %v1831, %v1832
        %v1834 = vand.u32 %v1833, 4294901760
        %1835 = vmatpush.xpose.msra.mxu0 %v1834
        %v1836 = vand.u32 %v1765, 4294901760
        %v1837 = vsub.f32 %v1765, %v1836
        %v1838 = vand.u32 %v1837, 4294901760
        %v1839 = vsub.f32 %v1837, %v1838
        %v1840 = vand.u32 %v1839, 4294901760
        %1841 = vmatpush.xpose.msra.mxu0 %v1840
        %v1842 = vand.u32 %v1764, 4294901760
        %v1843 = vsub.f32 %v1764, %v1842
        %v1844 = vand.u32 %v1843, 4294901760
        %v1845 = vsub.f32 %v1843, %v1844
        %v1846 = vand.u32 %v1845, 4294901760
        %1847 = vmatpush.xpose.msra.mxu0 %v1846
        %v1848 = vand.u32 %v1763, 4294901760
        %v1849 = vsub.f32 %v1763, %v1848
        %v1850 = vand.u32 %v1849, 4294901760
        %v1851 = vsub.f32 %v1849, %v1850
        %v1852 = vand.u32 %v1851, 4294901760
        %1853 = vmatpush.xpose.msra.mxu0 %v1852
        %v1854 = vand.u32 %v1762, 4294901760
        %v1855 = vsub.f32 %v1762, %v1854
        %v1856 = vand.u32 %v1855, 4294901760
        %v1857 = vsub.f32 %v1855, %v1856
        %v1858 = vand.u32 %v1857, 4294901760
        %1859 = vmatpush.xpose.msra.mxu0 %v1858
        %v1860 = vand.u32 %v1761, 4294901760
        %v1861 = vsub.f32 %v1761, %v1860
        %v1862 = vand.u32 %v1861, 4294901760
        %v1863 = vsub.f32 %v1861, %v1862
        %v1864 = vand.u32 %v1863, 4294901760
        %1865 = vmatpush.xpose.msra.mxu0 %v1864
        %v1866 = vand.u32 %v1760, 4294901760
        %v1867 = vsub.f32 %v1760, %v1866
        %v1868 = vand.u32 %v1867, 4294901760
        %v1869 = vsub.f32 %v1867, %v1868
        %v1870 = vand.u32 %v1869, 4294901760
        %1871 = vmatpush.xpose.msra.mxu0 %v1870
        %v1872 = vand.u32 %v1759, 4294901760
        %v1873 = vsub.f32 %v1759, %v1872
        %v1874 = vand.u32 %v1873, 4294901760
        %v1875 = vsub.f32 %v1873, %v1874
        %v1876 = vand.u32 %v1875, 4294901760
        %1877 = vmatpush.xpose.msra.mxu0 %v1876
        %v1878 = vand.u32 %v1758, 4294901760
        %v1879 = vsub.f32 %v1758, %v1878
        %v1880 = vand.u32 %v1879, 4294901760
        %v1881 = vsub.f32 %v1879, %v1880
        %v1882 = vand.u32 %v1881, 4294901760
        %1883 = vmatpush.xpose.msra.mxu0 %v1882
        %v1884 = vand.u32 %v1757, 4294901760
        %v1885 = vsub.f32 %v1757, %v1884
        %v1886 = vand.u32 %v1885, 4294901760
        %v1887 = vsub.f32 %v1885, %v1886
        %v1888 = vand.u32 %v1887, 4294901760
        %1889 = vmatpush.xpose.msra.mxu0 %v1888
        %v1890 = vand.u32 %v1756, 4294901760
        %v1891 = vsub.f32 %v1756, %v1890
        %v1892 = vand.u32 %v1891, 4294901760
        %v1893 = vsub.f32 %v1891, %v1892
        %v1894 = vand.u32 %v1893, 4294901760
        %1895 = vmatpush.xpose.msra.mxu0 %v1894
        %v1896 = vand.u32 %v1755, 4294901760
        %v1897 = vsub.f32 %v1755, %v1896
        %v1898 = vand.u32 %v1897, 4294901760
        %v1899 = vsub.f32 %v1897, %v1898
        %v1900 = vand.u32 %v1899, 4294901760
        %1901 = vmatpush.xpose.msra.mxu0 %v1900
        %v1902 = vand.u32 %v1754, 4294901760
        %v1903 = vsub.f32 %v1754, %v1902
        %v1904 = vand.u32 %v1903, 4294901760
        %v1905 = vsub.f32 %v1903, %v1904
        %v1906 = vand.u32 %v1905, 4294901760
        %1907 = vmatpush.xpose.msra.mxu0 %v1906
        %v1908 = vand.u32 %v1770, 4294901760
        %1909 = vmatmul.f32.gmra.mxu0 %v1908
        %v1910 = vpop.f32.mrf.mxu0
        %v1911 = vadd.f32 %v1810, %v1910
        %1912 = vdwg.mxu0
        %v1913 = vand.u32 %v1769, 4294901760
        %v1914 = vsub.f32 %v1769, %v1913
        %1915 = vmatpush.xpose.msra.mxu0 %v1914
        %v1916 = vand.u32 %v1768, 4294901760
        %v1917 = vsub.f32 %v1768, %v1916
        %1918 = vmatpush.xpose.msra.mxu0 %v1917
        %v1919 = vand.u32 %v1767, 4294901760
        %v1920 = vsub.f32 %v1767, %v1919
        %1921 = vmatpush.xpose.msra.mxu0 %v1920
        %v1922 = vand.u32 %v1766, 4294901760
        %v1923 = vsub.f32 %v1766, %v1922
        %1924 = vmatpush.xpose.msra.mxu0 %v1923
        %v1925 = vand.u32 %v1765, 4294901760
        %v1926 = vsub.f32 %v1765, %v1925
        %1927 = vmatpush.xpose.msra.mxu0 %v1926
        %v1928 = vand.u32 %v1764, 4294901760
        %v1929 = vsub.f32 %v1764, %v1928
        %1930 = vmatpush.xpose.msra.mxu0 %v1929
        %v1931 = vand.u32 %v1763, 4294901760
        %v1932 = vsub.f32 %v1763, %v1931
        %1933 = vmatpush.xpose.msra.mxu0 %v1932
        %v1934 = vand.u32 %v1762, 4294901760
        %v1935 = vsub.f32 %v1762, %v1934
        %1936 = vmatpush.xpose.msra.mxu0 %v1935
        %v1937 = vand.u32 %v1761, 4294901760
        %v1938 = vsub.f32 %v1761, %v1937
        %1939 = vmatpush.xpose.msra.mxu0 %v1938
        %v1940 = vand.u32 %v1760, 4294901760
        %v1941 = vsub.f32 %v1760, %v1940
        %1942 = vmatpush.xpose.msra.mxu0 %v1941
        %v1943 = vand.u32 %v1759, 4294901760
        %v1944 = vsub.f32 %v1759, %v1943
        %1945 = vmatpush.xpose.msra.mxu0 %v1944
        %v1946 = vand.u32 %v1758, 4294901760
        %v1947 = vsub.f32 %v1758, %v1946
        %1948 = vmatpush.xpose.msra.mxu0 %v1947
        %v1949 = vand.u32 %v1757, 4294901760
        %v1950 = vsub.f32 %v1757, %v1949
        %1951 = vmatpush.xpose.msra.mxu0 %v1950
        %v1952 = vand.u32 %v1756, 4294901760
        %v1953 = vsub.f32 %v1756, %v1952
        %1954 = vmatpush.xpose.msra.mxu0 %v1953
        %v1955 = vand.u32 %v1755, 4294901760
        %v1956 = vsub.f32 %v1755, %v1955
        %1957 = vmatpush.xpose.msra.mxu0 %v1956
        %v1958 = vand.u32 %v1754, 4294901760
        %v1959 = vsub.f32 %v1754, %v1958
        %1960 = vmatpush.xpose.msra.mxu0 %v1959
        %v1961 = vand.u32 %v1770, 4294901760
        %v1962 = vsub.f32 %v1770, %v1961
        %1963 = vmatmul.f32.gmra.mxu0 %v1962
        %v1964 = vpop.f32.mrf.mxu0
        %v1965 = vadd.f32 %v1911, %v1964
        %1966 = vdwg.mxu0
        %v1967 = vand.u32 %v1769, 4294901760
        %1968 = vmatpush.xpose.msra.mxu0 %v1967
        %v1969 = vand.u32 %v1768, 4294901760
        %1970 = vmatpush.xpose.msra.mxu0 %v1969
        %v1971 = vand.u32 %v1767, 4294901760
        %1972 = vmatpush.xpose.msra.mxu0 %v1971
        %v1973 = vand.u32 %v1766, 4294901760
        %1974 = vmatpush.xpose.msra.mxu0 %v1973
        %v1975 = vand.u32 %v1765, 4294901760
        %1976 = vmatpush.xpose.msra.mxu0 %v1975
        %v1977 = vand.u32 %v1764, 4294901760
        %1978 = vmatpush.xpose.msra.mxu0 %v1977
        %v1979 = vand.u32 %v1763, 4294901760
        %1980 = vmatpush.xpose.msra.mxu0 %v1979
        %v1981 = vand.u32 %v1762, 4294901760
        %1982 = vmatpush.xpose.msra.mxu0 %v1981
        %v1983 = vand.u32 %v1761, 4294901760
        %1984 = vmatpush.xpose.msra.mxu0 %v1983
        %v1985 = vand.u32 %v1760, 4294901760
        %1986 = vmatpush.xpose.msra.mxu0 %v1985
        %v1987 = vand.u32 %v1759, 4294901760
        %1988 = vmatpush.xpose.msra.mxu0 %v1987
        %v1989 = vand.u32 %v1758, 4294901760
        %1990 = vmatpush.xpose.msra.mxu0 %v1989
        %v1991 = vand.u32 %v1757, 4294901760
        %1992 = vmatpush.xpose.msra.mxu0 %v1991
        %v1993 = vand.u32 %v1756, 4294901760
        %1994 = vmatpush.xpose.msra.mxu0 %v1993
        %v1995 = vand.u32 %v1755, 4294901760
        %1996 = vmatpush.xpose.msra.mxu0 %v1995
        %v1997 = vand.u32 %v1754, 4294901760
        %1998 = vmatpush.xpose.msra.mxu0 %v1997
        %v1999 = vand.u32 %v1770, 4294901760
        %v2000 = vsub.f32 %v1770, %v1999
        %v2001 = vand.u32 %v2000, 4294901760
        %2002 = vmatmul.f32.gmra.mxu0 %v2001
        %v2003 = vpop.f32.mrf.mxu0
        %v2004 = vadd.f32 %v1965, %v2003
        %2005 = vdwg.mxu0
        %v2006 = vand.u32 %v1769, 4294901760
        %v2007 = vsub.f32 %v1769, %v2006
        %v2008 = vand.u32 %v2007, 4294901760
        %2009 = vmatpush.xpose.msra.mxu0 %v2008
        %v2010 = vand.u32 %v1768, 4294901760
        %v2011 = vsub.f32 %v1768, %v2010
        %v2012 = vand.u32 %v2011, 4294901760
        %2013 = vmatpush.xpose.msra.mxu0 %v2012
        %v2014 = vand.u32 %v1767, 4294901760
        %v2015 = vsub.f32 %v1767, %v2014
        %v2016 = vand.u32 %v2015, 4294901760
        %2017 = vmatpush.xpose.msra.mxu0 %v2016
        %v2018 = vand.u32 %v1766, 4294901760
        %v2019 = vsub.f32 %v1766, %v2018
        %v2020 = vand.u32 %v2019, 4294901760
        %2021 = vmatpush.xpose.msra.mxu0 %v2020
        %v2022 = vand.u32 %v1765, 4294901760
        %v2023 = vsub.f32 %v1765, %v2022
        %v2024 = vand.u32 %v2023, 4294901760
        %2025 = vmatpush.xpose.msra.mxu0 %v2024
        %v2026 = vand.u32 %v1764, 4294901760
        %v2027 = vsub.f32 %v1764, %v2026
        %v2028 = vand.u32 %v2027, 4294901760
        %2029 = vmatpush.xpose.msra.mxu0 %v2028
        %v2030 = vand.u32 %v1763, 4294901760
        %v2031 = vsub.f32 %v1763, %v2030
        %v2032 = vand.u32 %v2031, 4294901760
        %2033 = vmatpush.xpose.msra.mxu0 %v2032
        %v2034 = vand.u32 %v1762, 4294901760
        %v2035 = vsub.f32 %v1762, %v2034
        %v2036 = vand.u32 %v2035, 4294901760
        %2037 = vmatpush.xpose.msra.mxu0 %v2036
        %v2038 = vand.u32 %v1761, 4294901760
        %v2039 = vsub.f32 %v1761, %v2038
        %v2040 = vand.u32 %v2039, 4294901760
        %2041 = vmatpush.xpose.msra.mxu0 %v2040
        %v2042 = vand.u32 %v1760, 4294901760
        %v2043 = vsub.f32 %v1760, %v2042
        %v2044 = vand.u32 %v2043, 4294901760
        %2045 = vmatpush.xpose.msra.mxu0 %v2044
        %v2046 = vand.u32 %v1759, 4294901760
        %v2047 = vsub.f32 %v1759, %v2046
        %v2048 = vand.u32 %v2047, 4294901760
        %2049 = vmatpush.xpose.msra.mxu0 %v2048
        %v2050 = vand.u32 %v1758, 4294901760
        %v2051 = vsub.f32 %v1758, %v2050
        %v2052 = vand.u32 %v2051, 4294901760
        %2053 = vmatpush.xpose.msra.mxu0 %v2052
        %v2054 = vand.u32 %v1757, 4294901760
        %v2055 = vsub.f32 %v1757, %v2054
        %v2056 = vand.u32 %v2055, 4294901760
        %2057 = vmatpush.xpose.msra.mxu0 %v2056
        %v2058 = vand.u32 %v1756, 4294901760
        %v2059 = vsub.f32 %v1756, %v2058
        %v2060 = vand.u32 %v2059, 4294901760
        %2061 = vmatpush.xpose.msra.mxu0 %v2060
        %v2062 = vand.u32 %v1755, 4294901760
        %v2063 = vsub.f32 %v1755, %v2062
        %v2064 = vand.u32 %v2063, 4294901760
        %2065 = vmatpush.xpose.msra.mxu0 %v2064
        %v2066 = vand.u32 %v1754, 4294901760
        %v2067 = vsub.f32 %v1754, %v2066
        %v2068 = vand.u32 %v2067, 4294901760
        %2069 = vmatpush.xpose.msra.mxu0 %v2068
        %v2070 = vand.u32 %v1770, 4294901760
        %2071 = vmatmul.f32.gmra.mxu0 %v2070
        %v2072 = vpop.f32.mrf.mxu0
        %v2073 = vadd.f32 %v2004, %v2072
        %2074 = vdwg.mxu0
        %v2075 = vand.u32 %v1769, 4294901760
        %2076 = vmatpush.xpose.msra.mxu0 %v2075
        %v2077 = vand.u32 %v1768, 4294901760
        %2078 = vmatpush.xpose.msra.mxu0 %v2077
        %v2079 = vand.u32 %v1767, 4294901760
        %2080 = vmatpush.xpose.msra.mxu0 %v2079
        %v2081 = vand.u32 %v1766, 4294901760
        %2082 = vmatpush.xpose.msra.mxu0 %v2081
        %v2083 = vand.u32 %v1765, 4294901760
        %2084 = vmatpush.xpose.msra.mxu0 %v2083
        %v2085 = vand.u32 %v1764, 4294901760
        %2086 = vmatpush.xpose.msra.mxu0 %v2085
        %v2087 = vand.u32 %v1763, 4294901760
        %2088 = vmatpush.xpose.msra.mxu0 %v2087
        %v2089 = vand.u32 %v1762, 4294901760
        %2090 = vmatpush.xpose.msra.mxu0 %v2089
        %v2091 = vand.u32 %v1761, 4294901760
        %2092 = vmatpush.xpose.msra.mxu0 %v2091
        %v2093 = vand.u32 %v1760, 4294901760
        %2094 = vmatpush.xpose.msra.mxu0 %v2093
        %v2095 = vand.u32 %v1759, 4294901760
        %2096 = vmatpush.xpose.msra.mxu0 %v2095
        %v2097 = vand.u32 %v1758, 4294901760
        %2098 = vmatpush.xpose.msra.mxu0 %v2097
        %v2099 = vand.u32 %v1757, 4294901760
        %2100 = vmatpush.xpose.msra.mxu0 %v2099
        %v2101 = vand.u32 %v1756, 4294901760
        %2102 = vmatpush.xpose.msra.mxu0 %v2101
        %v2103 = vand.u32 %v1755, 4294901760
        %2104 = vmatpush.xpose.msra.mxu0 %v2103
        %v2105 = vand.u32 %v1754, 4294901760
        %2106 = vmatpush.xpose.msra.mxu0 %v2105
        %v2107 = vand.u32 %v1770, 4294901760
        %2108 = vmatmul.f32.gmra.mxu0 %v2107
        %v2109 = vpop.f32.mrf.mxu0
        %v2110 = vadd.f32 %v2073, %v2109
        %2111 = vdwg.mxu0
        %v2112 = vxor.u32 %v2110, 2147483648
        %v2113 = vmul.f32 %v2112, 1.442695
        %v2114 = vpow.pop %v2113
        %v2115 = vadd.f32 %v2114, 1.0
        %v2116 = vrcp.pop %v2115
        %v2117 = vmul.f32 %v2115, %v2116
        %v2118 = vsub.f32 1.0, %v2117
        %v2119 = vmul.f32 %v2116, %v2118
        %v2120 = vadd.f32 %v2116, %v2119
        %vm2121 = vweird.f32 %v2115
        %vm2122 = vweird.f32 %v2116
        %vm2123 = vmor %vm2121, %vm2122
        %v2124 = vsel %vm2123, %v2116, %v2120
        %v2125 = vand.u32 2147483647, %v2115
        %vm2126 = vcmp.eq.f32.partialorder %v2125, 8.507059e+37
        %v2127 = vand.u32 %v2115, 2147483648
        %v2128 = vor.u32 1.1754944e-38, %v2127
        %v2129 = vsel %vm2126, %v2128, %v2124
        %v2130 = vmul.f32 1.0, %v2129
        %2131 = vst [vmem:[%s190] sm:$0x1] %v2130
        %s2132 = sand.u32 %s115, 1
        %s2133 = scalar_lea.sflag [#allocation3], %s2132
        %s2134 = sand.u32 %s115, 1
        %s2135 = scalar_lea.vmem [#allocation2], %s2134
        // Predicated region
        $region37: #{tpu_custom_call.1} parent=35 // pred_check
          %p2136 = pneg %p125
        $region38: #{tpu_custom_call.1} parent=35 // pred_check_branch
          %2138 = sbr.rel (%p2136) target = $region40
        $region39: #{tpu_custom_call.1} parent=35 // pred_region
          %2140 = vsyncadd %s2133, 0
          %s2141 = scalar_lea.hbm %s4, %s18
          %s2143 = sshll.u32 %s2135, 4
          %s2144 = int_to_ptr.vmem [resolvable:$true] %s2143
          %s2145 = sshll.u32 %s2141, 4
          %s2146 = int_to_ptr.hbm [resolvable:$true] %s2145
          %2148 = dma.vmem_to_hbm [thread:$0]  %s2144, 16, %s2146, %s2133
        $region40: #{tpu_custom_call.1} parent=35 // pred_fallthru
          _
      $region36: #{tpu_custom_call.1} parent=5 // pred_fallthru
        _
      %p2149 = scmp.le.s32.totalorder 2, %s13
      // Predicated region
      $region41: #{tpu_custom_call.1} parent=5 // pred_check
        %p2150 = pneg %p2149
      $region42: #{tpu_custom_call.1} parent=5 // pred_check_branch
        %2152 = sbr.rel (%p2150) target = $region44
      $region43: #{tpu_custom_call.1} parent=5 // pred_region
        %s2153 = ssub.s32 %s13, 2
        // Predicated region
        $region45: #{tpu_custom_call.1} parent=43 // pred_check
          %p2154 = pneg %p131
        $region46: #{tpu_custom_call.1} parent=43 // pred_check_branch
          %2156 = sbr.rel (%p2154) target = $region48
        $region47: #{tpu_custom_call.1} parent=43 // pred_region
          %s2157 = sand.u32 %s116, 1
          %s2158 = scalar_lea.sflag [#allocation3], %s2157
          %s2159 = sand.u32 %s116, 1
          %s2160 = scalar_lea.vmem [#allocation2], %s2159
          %2162 = dma.done %s2158, 16
        $region48: #{tpu_custom_call.1} parent=43 // pred_fallthru
          _
      $region44: #{tpu_custom_call.1} parent=5 // pred_fallthru
        _
    $region6: #{tpu_custom_call.1} parent=1 // loop_footer
      %s17 = sadd.s32 1, %s13
    $region7: #{tpu_custom_call.1} parent=1 // loop_footer_branch
      %12 = sbr.rel target = $region3
    $region8: #{tpu_custom_call.1} parent=1 // loop_exit
      _
    %2163 = vsyncpa [#allocation3], 1
    %s2164 = scalar_lea.sflag [#allocation3], 1
    %2165 = vsyncpa %s2164, 1

</llo_original>
